<compile_context>
chip_gen: v7x
topology: tpu7x:2x2x1
jax: 0.10.0
libtpu: 0.0.40
codegen_flags: <defaults>
</compile_context>

<pallas_src>
import math
from functools import partial

import jax
import jax.numpy as jnp
from jax.experimental import pallas as pl
from jax.experimental.pallas import tpu as pltpu


def _mha_kernel(xq_ref, xkv_ref, wq_ref, wk_ref, wv_ref,
                bq_ref, bk_ref, bv_ref, wo_ref, bo_ref,
                o_ref,
                k_scr, v_scr, att_scr,
                *, num_heads, head_dim, compute_dtype, approx_recip):
    # xq_ref : (1, tq, D_in)  query rows for this grid step (compute_dtype)
    # xkv_ref: (1, S,  D_in)  full sequence (K/V projection source)
    # wq/wk/wv_ref: (D_in, E) fused, head-major columns; scale folded into wq
    # bq/bk/bv_ref: (1, E)    f32 biases (scale folded into bq)
    # wo_ref : (E, E)         Wo.T, rows head-major;  bo_ref: (1, E)
    # o_ref  : (1, tq, E)
    # k_scr/v_scr: (S, E) VMEM caches (compute_dtype); att_scr: (tq, E)
    cd = compute_dtype

    # ---- K/V projection: computed once per batch element, cached in VMEM ----
    @pl.when(pl.program_id(1) == 0)
    def _fill_kv():
        xkv = xkv_ref[0]                                               # (S, D_in)
        k2d = jnp.dot(xkv, wk_ref[...],
                      preferred_element_type=jnp.float32) + bk_ref[...]
        v2d = jnp.dot(xkv, wv_ref[...],
                      preferred_element_type=jnp.float32) + bv_ref[...]
        k_scr[...] = k2d.astype(k_scr.dtype)
        v_scr[...] = v2d.astype(v_scr.dtype)

    # ---- Q projection: one wide matmul, full MXU lanes (scale pre-folded) ----
    q2d = (jnp.dot(xq_ref[0], wq_ref[...],
                   preferred_element_type=jnp.float32)
           + bq_ref[...]).astype(cd)                                   # (tq, E)

    # ---- Per-head scaled dot-product attention (mask=None), unrolled over H ----
    for h in range(num_heads):
        lo = h * head_dim
        hi = lo + head_dim
        q_h = q2d[:, lo:hi]                                            # (tq, hd)
        k_h = k_scr[:, lo:hi]                                          # (S,  hd)
        v_h = v_scr[:, lo:hi]                                          # (S,  hd)

        logits = jnp.einsum('qd,kd->qk', q_h, k_h,
                            preferred_element_type=jnp.float32)        # (tq, S) f32
        logits = logits - jnp.max(logits, axis=-1, keepdims=True)
        p = jnp.exp(logits)
        denom = jnp.sum(p, axis=-1, keepdims=True)
        attn = (p * pl.reciprocal(denom, approx=approx_recip)).astype(cd)

        vals = jnp.dot(attn, v_h, preferred_element_type=jnp.float32)  # (tq, hd)
        att_scr[:, lo:hi] = vals.astype(att_scr.dtype)

    # ---- Output projection: single (tq, E) x (E, E) matmul, K = E ----
    out = jnp.dot(att_scr[...], wo_ref[...],
                  preferred_element_type=jnp.float32) + bo_ref[...]
    o_ref[0] = out.astype(o_ref.dtype)


def multihead_attention(x, wqkv, bqkv, wo, bo, num_heads, *,
                        q_block=256, compute_dtype=jnp.bfloat16):
    """x: (B, S, D_in); wqkv: (3E, D_in); bqkv: (3E,); wo: (E, E); bo: (E,)."""
    B, S, D_in = x.shape
    three_e = wqkv.shape[0]
    embed_dim = three_e // 3
    H = num_heads
    head_dim = embed_dim // H
    scale = 1.0 / math.sqrt(head_dim)

    # ---- host-side weight rearrangement (hoisted out of the kernel) ----
    # This module's qkv_proj packs output rows per head as [q_h | k_h | v_h]
    # blocks of 3*head_dim (NOT torch.nn.MultiheadAttention's [Wq;Wk;Wv]).
    w = wqkv.reshape(H, 3, head_dim, D_in)

    def _fuse(wi):  # (H, hd, D_in) -> (D_in, E), head-major column blocks
        return jnp.transpose(wi, (2, 0, 1)).reshape(D_in, embed_dim)

    wq_f = _fuse(w[:, 0]) * scale            # scale folded
    wk_f = _fuse(w[:, 1])
    wv_f = _fuse(w[:, 2])
    b3 = bqkv.reshape(H, 3, head_dim)
    bq_f = (b3[:, 0] * scale).reshape(1, embed_dim)   # f32 biases
    bk_f = b3[:, 1].reshape(1, embed_dim)
    bv_f = b3[:, 2].reshape(1, embed_dim)
    wo_t = jnp.swapaxes(wo, 0, 1)                     # (E, E), rows head-major
    bo_f = bo.reshape(1, embed_dim)

    cd = jnp.dtype(compute_dtype)
    approx = bool(cd != jnp.dtype(jnp.float32))
    x_c = x.astype(cd)                                # halve HBM traffic on bf16 path
    wq_f, wk_f, wv_f, wo_t = (a.astype(cd) for a in (wq_f, wk_f, wv_f, wo_t))

    tq = min(q_block, S)
    nq = pl.cdiv(S, tq)

    kernel = partial(_mha_kernel, num_heads=H, head_dim=head_dim,
                     compute_dtype=cd, approx_recip=approx)

    grid_spec = pltpu.PrefetchScalarGridSpec(
        num_scalar_prefetch=0,
        grid=(B, nq),
        in_specs=[
            pl.BlockSpec((1, tq, D_in), lambda b, qi: (b, qi, 0)),        # x (queries)
            pl.BlockSpec((1, S, D_in), lambda b, qi: (b, 0, 0)),          # x (keys/vals)
            pl.BlockSpec((D_in, embed_dim), lambda b, qi: (0, 0)),        # wq (fused)
            pl.BlockSpec((D_in, embed_dim), lambda b, qi: (0, 0)),        # wk (fused)
            pl.BlockSpec((D_in, embed_dim), lambda b, qi: (0, 0)),        # wv (fused)
            pl.BlockSpec((1, embed_dim), lambda b, qi: (0, 0)),           # bq
            pl.BlockSpec((1, embed_dim), lambda b, qi: (0, 0)),           # bk
            pl.BlockSpec((1, embed_dim), lambda b, qi: (0, 0)),           # bv
            pl.BlockSpec((embed_dim, embed_dim), lambda b, qi: (0, 0)),   # wo.T
            pl.BlockSpec((1, embed_dim), lambda b, qi: (0, 0)),           # bo
        ],
        out_specs=pl.BlockSpec((1, tq, embed_dim), lambda b, qi: (b, qi, 0)),
        scratch_shapes=[
            pltpu.VMEM((S, embed_dim), cd),    # K cache (per batch element)
            pltpu.VMEM((S, embed_dim), cd),    # V cache (per batch element)
            pltpu.VMEM((tq, embed_dim), cd),   # per-head values assembly buffer
        ],
    )

    return pl.pallas_call(
        kernel,
        out_shape=jax.ShapeDtypeStruct((B, S, embed_dim), x.dtype),
        grid_spec=grid_spec,
        compiler_params=pltpu.CompilerParams(
            # qi axis must be sequential so the K/V scratch filled at qi==0 is
            # legally reused by later query tiles of the same batch element.
            dimension_semantics=("parallel", "arbitrary"),
            vmem_limit_bytes=48 * 1024 * 1024),
    )(x_c, x_c, wq_f, wk_f, wv_f, bq_f, bk_f, bv_f, wo_t, bo_f)


def _xavier_uniform(key, shape):
    # nn.init.xavier_uniform_ for a Linear weight of shape (out, in)
    fan_out, fan_in = shape
    bound = math.sqrt(6.0 / (fan_in + fan_out))
    return jax.random.uniform(key, shape, jnp.float32, -bound, bound)


def _reference(x, wqkv, bqkv, wo, bo, num_heads):
    # Pure-JAX mirror of the PyTorch module's forward (mask=None).
    B, S, _ = x.shape
    embed_dim = wo.shape[0]
    head_dim = embed_dim // num_heads
    qkv = x @ wqkv.T + bqkv
    qkv = qkv.reshape(B, S, num_heads, 3 * head_dim).transpose(0, 2, 1, 3)
    q, k, v = jnp.split(qkv, 3, axis=-1)
    logits = jnp.einsum("bhqd,bhkd->bhqk", q, k) / math.sqrt(head_dim)
    attn = jax.nn.softmax(logits, axis=-1)
    vals = jnp.einsum("bhqk,bhkd->bhqd", attn, v)
    vals = vals.transpose(0, 2, 1, 3).reshape(B, S, embed_dim)
    return vals @ wo.T + bo


if __name__ == "__main__":
    batch, seq_len, input_dim = 2, 8, 32
    embed_dim, num_heads = 32, 4

    key = jax.random.PRNGKey(0)
    kx, kw1, kw2 = jax.random.split(key, 3)

    x = jax.random.normal(kx, (batch, seq_len, input_dim), jnp.float32)

    # Deterministic parameter init mirroring _reset_parameters()
    wqkv = _xavier_uniform(kw1, (3 * embed_dim, input_dim))
    bqkv = jnp.zeros((3 * embed_dim,), jnp.float32)
    wo = _xavier_uniform(kw2, (embed_dim, embed_dim))
    bo = jnp.zeros((embed_dim,), jnp.float32)

    ref = _reference(x, wqkv, bqkv, wo, bo, num_heads)

    # Exact path (f32 operands, exact reciprocal) — tight tolerance.
    out_f32 = multihead_attention(x, wqkv, bqkv, wo, bo, num_heads,
                                  compute_dtype=jnp.float32)
    out_f32 = jax.block_until_ready(out_f32)
    assert out_f32.shape == (batch, seq_len, embed_dim)
    assert jnp.allclose(out_f32, ref, atol=1e-4, rtol=1e-4)

    # Performance path (bf16 MXU operands, f32 accumulation, approx recip).
    out_bf16 = multihead_attention(x, wqkv, bqkv, wo, bo, num_heads,
                                   compute_dtype=jnp.bfloat16)
    out_bf16 = jax.block_until_ready(out_bf16)
    assert out_bf16.shape == (batch, seq_len, embed_dim)
    assert jnp.allclose(out_bf16, ref, atol=3e-2, rtol=3e-2)

    print("KERNEL_OK")
</pallas_src>

<mosaic_0001>
module attributes {stable_mosaic.version = 11 : i64} {
  func.func @_mha_kernel(%arg0: i32, %arg1: i32, %arg2: memref<1x8x32xf32, #tpu.memory_space<vmem>>, %arg3: memref<1x8x32xf32, #tpu.memory_space<vmem>>, %arg4: memref<32x32xf32, #tpu.memory_space<vmem>>, %arg5: memref<32x32xf32, #tpu.memory_space<vmem>>, %arg6: memref<32x32xf32, #tpu.memory_space<vmem>>, %arg7: memref<1x32xf32, #tpu.memory_space<vmem>>, %arg8: memref<1x32xf32, #tpu.memory_space<vmem>>, %arg9: memref<1x32xf32, #tpu.memory_space<vmem>>, %arg10: memref<32x32xf32, #tpu.memory_space<vmem>>, %arg11: memref<1x32xf32, #tpu.memory_space<vmem>>, %arg12: memref<1x8x32xf32, #tpu.memory_space<vmem>>, %arg13: memref<8x32xf32, #tpu.memory_space<vmem>>, %arg14: memref<8x32xf32, #tpu.memory_space<vmem>>, %arg15: memref<8x32xf32, #tpu.memory_space<vmem>>) attributes {dimension_semantics = [#tpu.dimension_semantics<parallel>, #tpu.dimension_semantics<arbitrary>], iteration_bounds = array<i64: 2, 1>, scalar_prefetch = 0 : i64, scratch_operands = 3 : i64, tpu.core_type = #tpu.core_type<tc>, window_params = [{transform_indices = @transform_0, window_bounds = array<i64: 1, 8, 32>}, {transform_indices = @transform_1, window_bounds = array<i64: 1, 8, 32>}, {pipeline_mode = #tpu.pipeline_mode<synchronous>, transform_indices = @transform_2, window_bounds = array<i64: 32, 32>}, {pipeline_mode = #tpu.pipeline_mode<synchronous>, transform_indices = @transform_3, window_bounds = array<i64: 32, 32>}, {pipeline_mode = #tpu.pipeline_mode<synchronous>, transform_indices = @transform_4, window_bounds = array<i64: 32, 32>}, {pipeline_mode = #tpu.pipeline_mode<synchronous>, transform_indices = @transform_5, window_bounds = array<i64: 1, 32>}, {pipeline_mode = #tpu.pipeline_mode<synchronous>, transform_indices = @transform_6, window_bounds = array<i64: 1, 32>}, {pipeline_mode = #tpu.pipeline_mode<synchronous>, transform_indices = @transform_7, window_bounds = array<i64: 1, 32>}, {pipeline_mode = #tpu.pipeline_mode<synchronous>, transform_indices = @transform_8, window_bounds = array<i64: 32, 32>}, {pipeline_mode = #tpu.pipeline_mode<synchronous>, transform_indices = @transform_9, window_bounds = array<i64: 1, 32>}, {transform_indices = @transform_10, window_bounds = array<i64: 1, 8, 32>}]} {
    %c0_i32 = arith.constant 0 : i32
    %0 = arith.cmpi eq, %arg1, %c0_i32 : i32
    %1 = arith.extui %0 : i1 to i32
    %c0_i32_0 = arith.constant 0 : i32
    %2 = arith.cmpi ne, %1, %c0_i32_0 : i32
    scf.if %2 {
      %c0_54 = arith.constant 0 : index
      %c0_55 = arith.constant 0 : index
      %c0_56 = arith.constant 0 : index
      %83 = vector.load %arg3[%c0_54, %c0_55, %c0_56] : memref<1x8x32xf32, #tpu.memory_space<vmem>>, vector<1x8x32xf32>
      %84 = vector.shape_cast %83 : vector<1x8x32xf32> to vector<8x32xf32>
      %c0_57 = arith.constant 0 : index
      %c0_58 = arith.constant 0 : index
      %85 = vector.load %arg5[%c0_57, %c0_58] : memref<32x32xf32, #tpu.memory_space<vmem>>, vector<32x32xf32>
      %cst_59 = arith.constant dense<0.000000e+00> : vector<8x32xf32>
      %86 = tpu.matmul %84, %85, %cst_59 {dimension_numbers = #tpu.dot_dimension_numbers<[1], [0], [0], [1], [0, 0, 1, 1], [], []>} : vector<8x32xf32>, vector<32x32xf32>, vector<8x32xf32> -> vector<8x32xf32>
      %c0_60 = arith.constant 0 : index
      %c0_61 = arith.constant 0 : index
      %87 = vector.load %arg8[%c0_60, %c0_61] : memref<1x32xf32, #tpu.memory_space<vmem>>, vector<1x32xf32>
      %88 = vector.broadcast %87 : vector<1x32xf32> to vector<8x32xf32>
      %89 = arith.addf %86, %88 : vector<8x32xf32>
      %c0_62 = arith.constant 0 : index
      %c0_63 = arith.constant 0 : index
      %90 = vector.load %arg6[%c0_62, %c0_63] : memref<32x32xf32, #tpu.memory_space<vmem>>, vector<32x32xf32>
      %cst_64 = arith.constant dense<0.000000e+00> : vector<8x32xf32>
      %91 = tpu.matmul %84, %90, %cst_64 {dimension_numbers = #tpu.dot_dimension_numbers<[1], [0], [0], [1], [0, 0, 1, 1], [], []>} : vector<8x32xf32>, vector<32x32xf32>, vector<8x32xf32> -> vector<8x32xf32>
      %c0_65 = arith.constant 0 : index
      %c0_66 = arith.constant 0 : index
      %92 = vector.load %arg9[%c0_65, %c0_66] : memref<1x32xf32, #tpu.memory_space<vmem>>, vector<1x32xf32>
      %93 = vector.broadcast %92 : vector<1x32xf32> to vector<8x32xf32>
      %94 = arith.addf %91, %93 : vector<8x32xf32>
      %c0_67 = arith.constant 0 : index
      %c0_68 = arith.constant 0 : index
      %95 = vector.load %arg13[%c0_67, %c0_68] : memref<8x32xf32, #tpu.memory_space<vmem>>, vector<8x32xf32>
      tpu.vector_store %arg13[%c0_67, %c0_68], %89 {strides = array<i32>} : memref<8x32xf32, #tpu.memory_space<vmem>>, vector<8x32xf32>,
      %c0_69 = arith.constant 0 : index
      %c0_70 = arith.constant 0 : index
      %96 = vector.load %arg14[%c0_69, %c0_70] : memref<8x32xf32, #tpu.memory_space<vmem>>, vector<8x32xf32>
      tpu.vector_store %arg14[%c0_69, %c0_70], %94 {strides = array<i32>} : memref<8x32xf32, #tpu.memory_space<vmem>>, vector<8x32xf32>,
    } else {
    }
    %c0 = arith.constant 0 : index
    %c0_1 = arith.constant 0 : index
    %c0_2 = arith.constant 0 : index
    %3 = vector.load %arg2[%c0, %c0_1, %c0_2] : memref<1x8x32xf32, #tpu.memory_space<vmem>>, vector<1x8x32xf32>
    %4 = vector.shape_cast %3 : vector<1x8x32xf32> to vector<8x32xf32>
    %c0_3 = arith.constant 0 : index
    %c0_4 = arith.constant 0 : index
    %5 = vector.load %arg4[%c0_3, %c0_4] : memref<32x32xf32, #tpu.memory_space<vmem>>, vector<32x32xf32>
    %cst = arith.constant dense<0.000000e+00> : vector<8x32xf32>
    %6 = tpu.matmul %4, %5, %cst {dimension_numbers = #tpu.dot_dimension_numbers<[1], [0], [0], [1], [0, 0, 1, 1], [], []>} : vector<8x32xf32>, vector<32x32xf32>, vector<8x32xf32> -> vector<8x32xf32>
    %c0_5 = arith.constant 0 : index
    %c0_6 = arith.constant 0 : index
    %7 = vector.load %arg7[%c0_5, %c0_6] : memref<1x32xf32, #tpu.memory_space<vmem>>, vector<1x32xf32>
    %8 = vector.broadcast %7 : vector<1x32xf32> to vector<8x32xf32>
    %9 = arith.addf %6, %8 : vector<8x32xf32>
    %10 = vector.extract_strided_slice %9 {offsets = [0, 0], sizes = [8, 8], strides = [1, 1]} : vector<8x32xf32> to vector<8x8xf32>
    %c0_7 = arith.constant 0 : index
    %c0_8 = arith.constant 0 : index
    %11 = vector.load %arg13[%c0_7, %c0_8] : memref<8x32xf32, #tpu.memory_space<vmem>>, vector<8x8xf32>
    %c0_9 = arith.constant 0 : index
    %c0_10 = arith.constant 0 : index
    %12 = vector.load %arg14[%c0_9, %c0_10] : memref<8x32xf32, #tpu.memory_space<vmem>>, vector<8x8xf32>
    "tpu.trace_start"() <{level = 10 : i32, message = "qd,kd->qk"}> : () -> ()
    %cst_11 = arith.constant dense<0.000000e+00> : vector<8x8xf32>
    %13 = tpu.matmul %10, %11, %cst_11 {dimension_numbers = #tpu.dot_dimension_numbers<[1], [1], [0], [0], [0, 0, 1, 0], [], []>} : vector<8x8xf32>, vector<8x8xf32>, vector<8x8xf32> -> vector<8x8xf32>
    "tpu.trace_stop"() : () -> ()
    %cst_12 = arith.constant dense<0xFF800000> : vector<8xf32>
    %14 = vector.multi_reduction <maximumf>, %13, %cst_12 [1] : vector<8x8xf32> to vector<8xf32>
    %15 = vector.shape_cast %14 : vector<8xf32> to vector<8x1xf32>
    %16 = vector.broadcast %15 : vector<8x1xf32> to vector<8x8xf32>
    %17 = arith.subf %13, %16 : vector<8x8xf32>
    %18 = math.exp %17 : vector<8x8xf32>
    %cst_13 = arith.constant dense<0.000000e+00> : vector<8xf32>
    %19 = vector.multi_reduction <add>, %18, %cst_13 [1] : vector<8x8xf32> to vector<8xf32>
    %20 = vector.shape_cast %19 : vector<8xf32> to vector<8x1xf32>
    %21 = tpu.reciprocal %20 : vector<8x1xf32> -> vector<8x1xf32>
    %22 = vector.broadcast %21 : vector<8x1xf32> to vector<8x8xf32>
    %23 = arith.mulf %18, %22 : vector<8x8xf32>
    %cst_14 = arith.constant dense<0.000000e+00> : vector<8x8xf32>
    %24 = tpu.matmul %23, %12, %cst_14 {dimension_numbers = #tpu.dot_dimension_numbers<[1], [0], [0], [1], [0, 0, 1, 1], [], []>} : vector<8x8xf32>, vector<8x8xf32>, vector<8x8xf32> -> vector<8x8xf32>
    %c0_15 = arith.constant 0 : index
    %c0_16 = arith.constant 0 : index
    %25 = vector.load %arg15[%c0_15, %c0_16] : memref<8x32xf32, #tpu.memory_space<vmem>>, vector<8x8xf32>
    tpu.vector_store %arg15[%c0_15, %c0_16], %24 {strides = array<i32>} : memref<8x32xf32, #tpu.memory_space<vmem>>, vector<8x8xf32>,
    %26 = vector.extract_strided_slice %9 {offsets = [0, 8], sizes = [8, 8], strides = [1, 1]} : vector<8x32xf32> to vector<8x8xf32>
    %c0_17 = arith.constant 0 : index
    %c8 = arith.constant 8 : index
    %27 = vector.load %arg13[%c0_17, %c8] : memref<8x32xf32, #tpu.memory_space<vmem>>, vector<8x8xf32>
    %c0_18 = arith.constant 0 : index
    %c8_19 = arith.constant 8 : index
    %28 = vector.load %arg14[%c0_18, %c8_19] : memref<8x32xf32, #tpu.memory_space<vmem>>, vector<8x8xf32>
    "tpu.trace_start"() <{level = 10 : i32, message = "qd,kd->qk"}> : () -> ()
    %cst_20 = arith.constant dense<0.000000e+00> : vector<8x8xf32>
    %29 = tpu.matmul %26, %27, %cst_20 {dimension_numbers = #tpu.dot_dimension_numbers<[1], [1], [0], [0], [0, 0, 1, 0], [], []>} : vector<8x8xf32>, vector<8x8xf32>, vector<8x8xf32> -> vector<8x8xf32>
    "tpu.trace_stop"() : () -> ()
    %cst_21 = arith.constant dense<0xFF800000> : vector<8xf32>
    %30 = vector.multi_reduction <maximumf>, %29, %cst_21 [1] : vector<8x8xf32> to vector<8xf32>
    %31 = vector.shape_cast %30 : vector<8xf32> to vector<8x1xf32>
    %32 = vector.broadcast %31 : vector<8x1xf32> to vector<8x8xf32>
    %33 = arith.subf %29, %32 : vector<8x8xf32>
    %34 = math.exp %33 : vector<8x8xf32>
    %cst_22 = arith.constant dense<0.000000e+00> : vector<8xf32>
    %35 = vector.multi_reduction <add>, %34, %cst_22 [1] : vector<8x8xf32> to vector<8xf32>
    %36 = vector.shape_cast %35 : vector<8xf32> to vector<8x1xf32>
    %37 = tpu.reciprocal %36 : vector<8x1xf32> -> vector<8x1xf32>
    %38 = vector.broadcast %37 : vector<8x1xf32> to vector<8x8xf32>
    %39 = arith.mulf %34, %38 : vector<8x8xf32>
    %cst_23 = arith.constant dense<0.000000e+00> : vector<8x8xf32>
    %40 = tpu.matmul %39, %28, %cst_23 {dimension_numbers = #tpu.dot_dimension_numbers<[1], [0], [0], [1], [0, 0, 1, 1], [], []>} : vector<8x8xf32>, vector<8x8xf32>, vector<8x8xf32> -> vector<8x8xf32>
    %c0_24 = arith.constant 0 : index
    %c8_25 = arith.constant 8 : index
    %41 = vector.load %arg15[%c0_24, %c8_25] : memref<8x32xf32, #tpu.memory_space<vmem>>, vector<8x8xf32>
    tpu.vector_store %arg15[%c0_24, %c8_25], %40 {strides = array<i32>} : memref<8x32xf32, #tpu.memory_space<vmem>>, vector<8x8xf32>,
    %42 = vector.extract_strided_slice %9 {offsets = [0, 16], sizes = [8, 8], strides = [1, 1]} : vector<8x32xf32> to vector<8x8xf32>
    %c0_26 = arith.constant 0 : index
    %c16 = arith.constant 16 : index
    %43 = vector.load %arg13[%c0_26, %c16] : memref<8x32xf32, #tpu.memory_space<vmem>>, vector<8x8xf32>
    %c0_27 = arith.constant 0 : index
    %c16_28 = arith.constant 16 : index
    %44 = vector.load %arg14[%c0_27, %c16_28] : memref<8x32xf32, #tpu.memory_space<vmem>>, vector<8x8xf32>
    "tpu.trace_start"() <{level = 10 : i32, message = "qd,kd->qk"}> : () -> ()
    %cst_29 = arith.constant dense<0.000000e+00> : vector<8x8xf32>
    %45 = tpu.matmul %42, %43, %cst_29 {dimension_numbers = #tpu.dot_dimension_numbers<[1], [1], [0], [0], [0, 0, 1, 0], [], []>} : vector<8x8xf32>, vector<8x8xf32>, vector<8x8xf32> -> vector<8x8xf32>
    "tpu.trace_stop"() : () -> ()
    %cst_30 = arith.constant dense<0xFF800000> : vector<8xf32>
    %46 = vector.multi_reduction <maximumf>, %45, %cst_30 [1] : vector<8x8xf32> to vector<8xf32>
    %47 = vector.shape_cast %46 : vector<8xf32> to vector<8x1xf32>
    %48 = vector.broadcast %47 : vector<8x1xf32> to vector<8x8xf32>
    %49 = arith.subf %45, %48 : vector<8x8xf32>
    %50 = math.exp %49 : vector<8x8xf32>
    %cst_31 = arith.constant dense<0.000000e+00> : vector<8xf32>
    %51 = vector.multi_reduction <add>, %50, %cst_31 [1] : vector<8x8xf32> to vector<8xf32>
    %52 = vector.shape_cast %51 : vector<8xf32> to vector<8x1xf32>
    %53 = tpu.reciprocal %52 : vector<8x1xf32> -> vector<8x1xf32>
    %54 = vector.broadcast %53 : vector<8x1xf32> to vector<8x8xf32>
    %55 = arith.mulf %50, %54 : vector<8x8xf32>
    %cst_32 = arith.constant dense<0.000000e+00> : vector<8x8xf32>
    %56 = tpu.matmul %55, %44, %cst_32 {dimension_numbers = #tpu.dot_dimension_numbers<[1], [0], [0], [1], [0, 0, 1, 1], [], []>} : vector<8x8xf32>, vector<8x8xf32>, vector<8x8xf32> -> vector<8x8xf32>
    %c0_33 = arith.constant 0 : index
    %c16_34 = arith.constant 16 : index
    %57 = vector.load %arg15[%c0_33, %c16_34] : memref<8x32xf32, #tpu.memory_space<vmem>>, vector<8x8xf32>
    tpu.vector_store %arg15[%c0_33, %c16_34], %56 {strides = array<i32>} : memref<8x32xf32, #tpu.memory_space<vmem>>, vector<8x8xf32>,
    %58 = vector.extract_strided_slice %9 {offsets = [0, 24], sizes = [8, 8], strides = [1, 1]} : vector<8x32xf32> to vector<8x8xf32>
    %c0_35 = arith.constant 0 : index
    %c24 = arith.constant 24 : index
    %59 = vector.load %arg13[%c0_35, %c24] : memref<8x32xf32, #tpu.memory_space<vmem>>, vector<8x8xf32>
    %c0_36 = arith.constant 0 : index
    %c24_37 = arith.constant 24 : index
    %60 = vector.load %arg14[%c0_36, %c24_37] : memref<8x32xf32, #tpu.memory_space<vmem>>, vector<8x8xf32>
    "tpu.trace_start"() <{level = 10 : i32, message = "qd,kd->qk"}> : () -> ()
    %cst_38 = arith.constant dense<0.000000e+00> : vector<8x8xf32>
    %61 = tpu.matmul %58, %59, %cst_38 {dimension_numbers = #tpu.dot_dimension_numbers<[1], [1], [0], [0], [0, 0, 1, 0], [], []>} : vector<8x8xf32>, vector<8x8xf32>, vector<8x8xf32> -> vector<8x8xf32>
    "tpu.trace_stop"() : () -> ()
    %cst_39 = arith.constant dense<0xFF800000> : vector<8xf32>
    %62 = vector.multi_reduction <maximumf>, %61, %cst_39 [1] : vector<8x8xf32> to vector<8xf32>
    %63 = vector.shape_cast %62 : vector<8xf32> to vector<8x1xf32>
    %64 = vector.broadcast %63 : vector<8x1xf32> to vector<8x8xf32>
    %65 = arith.subf %61, %64 : vector<8x8xf32>
    %66 = math.exp %65 : vector<8x8xf32>
    %cst_40 = arith.constant dense<0.000000e+00> : vector<8xf32>
    %67 = vector.multi_reduction <add>, %66, %cst_40 [1] : vector<8x8xf32> to vector<8xf32>
    %68 = vector.shape_cast %67 : vector<8xf32> to vector<8x1xf32>
    %69 = tpu.reciprocal %68 : vector<8x1xf32> -> vector<8x1xf32>
    %70 = vector.broadcast %69 : vector<8x1xf32> to vector<8x8xf32>
    %71 = arith.mulf %66, %70 : vector<8x8xf32>
    %cst_41 = arith.constant dense<0.000000e+00> : vector<8x8xf32>
    %72 = tpu.matmul %71, %60, %cst_41 {dimension_numbers = #tpu.dot_dimension_numbers<[1], [0], [0], [1], [0, 0, 1, 1], [], []>} : vector<8x8xf32>, vector<8x8xf32>, vector<8x8xf32> -> vector<8x8xf32>
    %c0_42 = arith.constant 0 : index
    %c24_43 = arith.constant 24 : index
    %73 = vector.load %arg15[%c0_42, %c24_43] : memref<8x32xf32, #tpu.memory_space<vmem>>, vector<8x8xf32>
    tpu.vector_store %arg15[%c0_42, %c24_43], %72 {strides = array<i32>} : memref<8x32xf32, #tpu.memory_space<vmem>>, vector<8x8xf32>,
    %c0_44 = arith.constant 0 : index
    %c0_45 = arith.constant 0 : index
    %74 = vector.load %arg15[%c0_44, %c0_45] : memref<8x32xf32, #tpu.memory_space<vmem>>, vector<8x32xf32>
    %c0_46 = arith.constant 0 : index
    %c0_47 = arith.constant 0 : index
    %75 = vector.load %arg10[%c0_46, %c0_47] : memref<32x32xf32, #tpu.memory_space<vmem>>, vector<32x32xf32>
    %cst_48 = arith.constant dense<0.000000e+00> : vector<8x32xf32>
    %76 = tpu.matmul %74, %75, %cst_48 {dimension_numbers = #tpu.dot_dimension_numbers<[1], [0], [0], [1], [0, 0, 1, 1], [], []>} : vector<8x32xf32>, vector<32x32xf32>, vector<8x32xf32> -> vector<8x32xf32>
    %c0_49 = arith.constant 0 : index
    %c0_50 = arith.constant 0 : index
    %77 = vector.load %arg11[%c0_49, %c0_50] : memref<1x32xf32, #tpu.memory_space<vmem>>, vector<1x32xf32>
    %78 = vector.broadcast %77 : vector<1x32xf32> to vector<8x32xf32>
    %79 = arith.addf %76, %78 : vector<8x32xf32>
    %c0_51 = arith.constant 0 : index
    %c0_52 = arith.constant 0 : index
    %c0_53 = arith.constant 0 : index
    %80 = vector.load %arg12[%c0_51, %c0_52, %c0_53] : memref<1x8x32xf32, #tpu.memory_space<vmem>>, vector<1x8x32xf32>
    %81 = vector.shape_cast %80 : vector<1x8x32xf32> to vector<8x32xf32>
    %82 = vector.shape_cast %79 : vector<8x32xf32> to vector<1x8x32xf32>
    tpu.vector_store %arg12[%c0_51, %c0_52, %c0_53], %82 {strides = array<i32>} : memref<1x8x32xf32, #tpu.memory_space<vmem>>, vector<1x8x32xf32>,
    return
  }
  func.func @transform_0(%arg0: i32, %arg1: i32) -> (i32, i32, i32) {
    %c0_i32 = arith.constant 0 : i32
    %c0_i32_0 = arith.constant 0 : i32
    return %arg0, %arg1, %c0_i32 : i32, i32, i32
  }
  func.func @transform_1(%arg0: i32, %arg1: i32) -> (i32, i32, i32) {
    %c0_i32 = arith.constant 0 : i32
    %c0_i32_0 = arith.constant 0 : i32
    %c0_i32_1 = arith.constant 0 : i32
    return %arg0, %c0_i32, %c0_i32_0 : i32, i32, i32
  }
  func.func @transform_2(%arg0: i32, %arg1: i32) -> (i32, i32) {
    %c0_i32 = arith.constant 0 : i32
    %c0_i32_0 = arith.constant 0 : i32
    %c0_i32_1 = arith.constant 0 : i32
    return %c0_i32, %c0_i32_0 : i32, i32
  }
  func.func @transform_3(%arg0: i32, %arg1: i32) -> (i32, i32) {
    %c0_i32 = arith.constant 0 : i32
    %c0_i32_0 = arith.constant 0 : i32
    %c0_i32_1 = arith.constant 0 : i32
    return %c0_i32, %c0_i32_0 : i32, i32
  }
  func.func @transform_4(%arg0: i32, %arg1: i32) -> (i32, i32) {
    %c0_i32 = arith.constant 0 : i32
    %c0_i32_0 = arith.constant 0 : i32
    %c0_i32_1 = arith.constant 0 : i32
    return %c0_i32, %c0_i32_0 : i32, i32
  }
  func.func @transform_5(%arg0: i32, %arg1: i32) -> (i32, i32) {
    %c0_i32 = arith.constant 0 : i32
    %c0_i32_0 = arith.constant 0 : i32
    %c0_i32_1 = arith.constant 0 : i32
    return %c0_i32, %c0_i32_0 : i32, i32
  }
  func.func @transform_6(%arg0: i32, %arg1: i32) -> (i32, i32) {
    %c0_i32 = arith.constant 0 : i32
    %c0_i32_0 = arith.constant 0 : i32
    %c0_i32_1 = arith.constant 0 : i32
    return %c0_i32, %c0_i32_0 : i32, i32
  }
  func.func @transform_7(%arg0: i32, %arg1: i32) -> (i32, i32) {
    %c0_i32 = arith.constant 0 : i32
    %c0_i32_0 = arith.constant 0 : i32
    %c0_i32_1 = arith.constant 0 : i32
    return %c0_i32, %c0_i32_0 : i32, i32
  }
  func.func @transform_8(%arg0: i32, %arg1: i32) -> (i32, i32) {
    %c0_i32 = arith.constant 0 : i32
    %c0_i32_0 = arith.constant 0 : i32
    %c0_i32_1 = arith.constant 0 : i32
    return %c0_i32, %c0_i32_0 : i32, i32
  }
  func.func @transform_9(%arg0: i32, %arg1: i32) -> (i32, i32) {
    %c0_i32 = arith.constant 0 : i32
    %c0_i32_0 = arith.constant 0 : i32
    %c0_i32_1 = arith.constant 0 : i32
    return %c0_i32, %c0_i32_0 : i32, i32
  }
  func.func @transform_10(%arg0: i32, %arg1: i32) -> (i32, i32, i32) {
    %c0_i32 = arith.constant 0 : i32
    %c0_i32_0 = arith.constant 0 : i32
    return %arg0, %arg1, %c0_i32 : i32, i32, i32
  }
}

</mosaic_0001>

<llo_original>
// kernel: tpu_custom_call.1
$region0: #{tpu_custom_call.1}
  #allocation0 [shape = 'u32[]', space=smem, size = 0x4, offset = 0x4, fixed_abs, tag = 'smem constant byte address 0x4 - core index']
  #allocation1 [shape = 'u32[144,128]{1,0:T(1,128)}', space=vmem, size = 0x12000, scoped, tag = 'internal scratch']
  #allocation2 [shape = 'f32[8,32]{1,0:T(8,128)}', space=vmem, size = 0x1000, scoped, tag = 'scratch operand']
  #allocation3 [shape = 'f32[8,32]{1,0:T(8,128)}', space=vmem, size = 0x1000, scoped, tag = 'scratch operand']
  #allocation4 [shape = 'f32[8,32]{1,0:T(8,128)}', space=vmem, size = 0x1000, scoped, tag = 'scratch operand']
  %s0 = inlined_call_operand.hbm [shape: f32[2,8,32], index: 0, kind: input, shape index: {}]
  %s1 = inlined_call_operand.hbm [shape: f32[2,8,32], index: 1, kind: input, shape index: {}]
  %s2 = inlined_call_operand.hbm [shape: f32[32,32], index: 2, kind: input, shape index: {}]
  %s3 = inlined_call_operand.hbm [shape: f32[32,32], index: 3, kind: input, shape index: {}]
  %s4 = inlined_call_operand.hbm [shape: f32[32,32], index: 4, kind: input, shape index: {}]
  %s5 = inlined_call_operand.vmem [shape: f32[1,32], index: 5, kind: input, shape index: {}]
  %s6 = inlined_call_operand.vmem [shape: f32[1,32], index: 6, kind: input, shape index: {}]
  %s7 = inlined_call_operand.vmem [shape: f32[1,32], index: 7, kind: input, shape index: {}]
  %s8 = inlined_call_operand.hbm [shape: f32[32,32], index: 8, kind: input, shape index: {}]
  %s9 = inlined_call_operand.vmem [shape: f32[1,32], index: 9, kind: input, shape index: {}]
  %s10 = inlined_call_operand.hbm [shape: f32[2,8,32], index: 10, kind: output, shape index: {}]
  %s11 = sld [smem:[#allocation0]]
  $region101: #{tpu_custom_call.1} parent=0
    _
  %s13 = ssub.s32 1, %s11
  %s14 = scalar_select 0, %s13, %s11
  $region1: #{tpu_custom_call.1} parent=0
    #allocation5 [shape = 'u8[8192]{0}', space=vmem, size = 0x2000, scoped, tag = 'input window, operand 0']
    #allocation6 [shape = 's32[2]{0}', space=sflag, size = 0x8, scoped, tag = 'scoped memory for tpu_custom_call.1']
    #allocation7 [shape = 's32[2]{0}', space=sflag, size = 0x8, scoped, tag = 'scoped memory for tpu_custom_call.1']
    #allocation8 [shape = 'u8[8192]{0}', space=vmem, size = 0x2000, scoped, tag = 'input window, operand 1']
    #allocation9 [shape = 's32[2]{0}', space=sflag, size = 0x8, scoped, tag = 'scoped memory for tpu_custom_call.1']
    #allocation10 [shape = 'u8[16384]{0}', space=vmem, size = 0x4000, scoped, tag = 'input window, operand 2, single buffered']
    #allocation11 [shape = 'u8[16384]{0}', space=vmem, size = 0x4000, scoped, tag = 'input window, operand 3, single buffered']
    #allocation12 [shape = 's32[1]{0}', space=sflag, size = 0x4, scoped, tag = 'scoped memory for tpu_custom_call.1']
    #allocation13 [shape = 'u8[16384]{0}', space=vmem, size = 0x4000, scoped, tag = 'input window, operand 4, single buffered']
    #allocation14 [shape = 'u8[16384]{0}', space=vmem, size = 0x4000, scoped, tag = 'input window, operand 8, single buffered']
    #allocation15 [shape = 's32[1]{0}', space=sflag, size = 0x4, scoped, tag = 'scoped memory for tpu_custom_call.1']
    #allocation16 [shape = 'u8[8192]{0}', space=vmem, size = 0x2000, scoped, tag = 'output window, operand 0']
    %15 = vsyncpa [#allocation6], 0
    %s16 = scalar_lea.sflag [#allocation6], 1
    %17 = vsyncpa %s16, 0
    %18 = vsyncpa [#allocation9], 0
    %s19 = scalar_lea.sflag [#allocation9], 1
    %20 = vsyncpa %s19, 0
    %21 = vsyncpa [#allocation12], 0
    %22 = vsyncpa [#allocation15], 0
    %23 = vsyncpa [#allocation7], 0
    %s24 = scalar_lea.sflag [#allocation7], 1
    %25 = vsyncpa %s24, 0
    loop: start=0, step=1, limit=4
    $region2: #{tpu_custom_call.1} parent=1 // loop_pre_header
      _
    $region3: #{tpu_custom_call.1} parent=1 // loop_header
      %s27 = sphi 0, %s31
      %p28 = scmp.ge.s32.totalorder %s27, 4
      %s34 = sphi 0, %s46
      %s35 = sphi 0, %s42
      %s36 = sphi 0, %s34
      %s37 = sphi 0, %s35
      %s38 = sphi 0, %s36
      %s39 = sphi 0, %s37
      %s51 = sphi 0, %s53
      %s54 = sphi 0, %s51
      %s55 = sphi 0, %s54
      %s71 = sphi 0, %s55
      %s77 = sphi 0, %s79
      %s80 = sphi 0, %s77
      %s81 = sphi 0, %s80
      %s97 = sphi 0, %s81
      %s101 = sphi 0, %s101
      %s103 = sphi 0, %s101
      %s104 = sphi 0, %s103
      %s118 = sphi 0, %s104
      %s122 = sphi 0, %s122
      %s124 = sphi 0, %s122
      %s125 = sphi 0, %s124
      %s139 = sphi 0, %s125
      %s143 = sphi 0, %s143
      %s145 = sphi 0, %s143
      %s146 = sphi 0, %s145
      %s160 = sphi 0, %s146
      %s164 = sphi 0, %s164
      %s166 = sphi 0, %s164
      %s167 = sphi 0, %s166
      %s181 = sphi 0, %s167
      %s185 = sphi 0, %s185
      %s187 = sphi 0, %s185
      %s188 = sphi 0, %s187
      %s202 = sphi 0, %s188
      %s206 = sphi 0, %s206
      %s208 = sphi 0, %s206
      %s209 = sphi 0, %s208
      %s223 = sphi 0, %s209
      %s227 = sphi 0, %s227
      %s229 = sphi 0, %s227
      %s230 = sphi 0, %s229
      %s244 = sphi 0, %s230
      %s248 = sphi 0, %s248
      %s250 = sphi 0, %s248
      %s251 = sphi 0, %s250
      %s265 = sphi 0, %s251
      %s273 = sphi 0, %s275
      %s276 = sphi 0, %s273
      %s277 = sphi 0, %s276
      %s293 = sphi 0, %s277
    $region4: #{tpu_custom_call.1} parent=1 // loop_header_branch
      %30 = sbr.rel (%p28) target = $region8
    $region5: #{tpu_custom_call.1} parent=1 // loop_body
      %s32 = ssub.s32 %s27, 1
      %s33 = ssub.s32 %s27, 2
      %s40 = sadd.s32 1, %s35
      %p41 = scmp.ge.s32.totalorder %s40, 1
      %s42 = scalar_select %p41, 0, %s40
      %s43 = sadd.s32 1, %s34
      %s44 = scalar_select %p41, %s43, %s34
      %p45 = scmp.ge.s32.totalorder %s44, 2
      %s46 = scalar_select %p45, 0, %s44
      %s47 = ssub.s32 %s34, %s46
      %s48 = ssub.s32 %s35, %s42
      %s49 = sor.u32 %s47, %s48
      %p50 = scmp.eq.s32.totalorder %s49, 0
      %s52 = sadd.s32 %s51, 1
      %s53 = scalar_select %p50, %s51, %s52
      %p56 = pneg %p50
      %p57 = scmp.eq.s32.totalorder %s27, 1
      %p58 = por %p56, %p57
      %p59 = scmp.ne.s32.totalorder %s51, %s54
      %p60 = scmp.eq.s32.totalorder %s27, 0
      %p61 = por %p59, %p60
      %p62 = scmp.ne.s32.totalorder %s51, %s54
      %p63 = scmp.eq.s32.totalorder %s32, 1
      %p64 = por %p62, %p63
      %p65 = scmp.ne.s32.totalorder %s54, %s55
      %p66 = scmp.eq.s32.totalorder %s32, 0
      %p67 = por %p65, %p66
      %p68 = scmp.ne.s32.totalorder %s54, %s55
      %p69 = scmp.eq.s32.totalorder %s33, 1
      %p70 = por %p68, %p69
      %p72 = scmp.ne.s32.totalorder %s55, %s71
      %p73 = scmp.eq.s32.totalorder %s33, 0
      %p74 = por %p72, %p73
      %s75 = ssub.s32 %s34, %s46
      %p76 = scmp.eq.s32.totalorder %s75, 0
      %s78 = sadd.s32 %s77, 1
      %s79 = scalar_select %p76, %s77, %s78
      %p82 = pneg %p76
      %p83 = scmp.eq.s32.totalorder %s27, 1
      %p84 = por %p82, %p83
      %p85 = scmp.ne.s32.totalorder %s77, %s80
      %p86 = scmp.eq.s32.totalorder %s27, 0
      %p87 = por %p85, %p86
      %p88 = scmp.ne.s32.totalorder %s77, %s80
      %p89 = scmp.eq.s32.totalorder %s32, 1
      %p90 = por %p88, %p89
      %p91 = scmp.ne.s32.totalorder %s80, %s81
      %p92 = scmp.eq.s32.totalorder %s32, 0
      %p93 = por %p91, %p92
      %p94 = scmp.ne.s32.totalorder %s80, %s81
      %p95 = scmp.eq.s32.totalorder %s33, 1
      %p96 = por %p94, %p95
      %p98 = scmp.ne.s32.totalorder %s81, %s97
      %p99 = scmp.eq.s32.totalorder %s33, 0
      %p100 = por %p98, %p99
      %s102 = sadd.s32 %s101, 1
      %p105 = scmp.eq.s32.totalorder %s27, 1
      %p106 = scmp.ne.s32.totalorder %s101, %s103
      %p107 = scmp.eq.s32.totalorder %s27, 0
      %p108 = por %p106, %p107
      %p109 = scmp.ne.s32.totalorder %s101, %s103
      %p110 = scmp.eq.s32.totalorder %s32, 1
      %p111 = por %p109, %p110
      %p112 = scmp.ne.s32.totalorder %s103, %s104
      %p113 = scmp.eq.s32.totalorder %s32, 0
      %p114 = por %p112, %p113
      %p115 = scmp.ne.s32.totalorder %s103, %s104
      %p116 = scmp.eq.s32.totalorder %s33, 1
      %p117 = por %p115, %p116
      %p119 = scmp.ne.s32.totalorder %s104, %s118
      %p120 = scmp.eq.s32.totalorder %s33, 0
      %p121 = por %p119, %p120
      %s123 = sadd.s32 %s122, 1
      %p126 = scmp.eq.s32.totalorder %s27, 1
      %p127 = scmp.ne.s32.totalorder %s122, %s124
      %p128 = scmp.eq.s32.totalorder %s27, 0
      %p129 = por %p127, %p128
      %p130 = scmp.ne.s32.totalorder %s122, %s124
      %p131 = scmp.eq.s32.totalorder %s32, 1
      %p132 = por %p130, %p131
      %p133 = scmp.ne.s32.totalorder %s124, %s125
      %p134 = scmp.eq.s32.totalorder %s32, 0
      %p135 = por %p133, %p134
      %p136 = scmp.ne.s32.totalorder %s124, %s125
      %p137 = scmp.eq.s32.totalorder %s33, 1
      %p138 = por %p136, %p137
      %p140 = scmp.ne.s32.totalorder %s125, %s139
      %p141 = scmp.eq.s32.totalorder %s33, 0
      %p142 = por %p140, %p141
      %s144 = sadd.s32 %s143, 1
      %p147 = scmp.eq.s32.totalorder %s27, 1
      %p148 = scmp.ne.s32.totalorder %s143, %s145
      %p149 = scmp.eq.s32.totalorder %s27, 0
      %p150 = por %p148, %p149
      %p151 = scmp.ne.s32.totalorder %s143, %s145
      %p152 = scmp.eq.s32.totalorder %s32, 1
      %p153 = por %p151, %p152
      %p154 = scmp.ne.s32.totalorder %s145, %s146
      %p155 = scmp.eq.s32.totalorder %s32, 0
      %p156 = por %p154, %p155
      %p157 = scmp.ne.s32.totalorder %s145, %s146
      %p158 = scmp.eq.s32.totalorder %s33, 1
      %p159 = por %p157, %p158
      %p161 = scmp.ne.s32.totalorder %s146, %s160
      %p162 = scmp.eq.s32.totalorder %s33, 0
      %p163 = por %p161, %p162
      %s165 = sadd.s32 %s164, 1
      %p168 = scmp.eq.s32.totalorder %s27, 1
      %p169 = scmp.ne.s32.totalorder %s164, %s166
      %p170 = scmp.eq.s32.totalorder %s27, 0
      %p171 = por %p169, %p170
      %p172 = scmp.ne.s32.totalorder %s164, %s166
      %p173 = scmp.eq.s32.totalorder %s32, 1
      %p174 = por %p172, %p173
      %p175 = scmp.ne.s32.totalorder %s166, %s167
      %p176 = scmp.eq.s32.totalorder %s32, 0
      %p177 = por %p175, %p176
      %p178 = scmp.ne.s32.totalorder %s166, %s167
      %p179 = scmp.eq.s32.totalorder %s33, 1
      %p180 = por %p178, %p179
      %p182 = scmp.ne.s32.totalorder %s167, %s181
      %p183 = scmp.eq.s32.totalorder %s33, 0
      %p184 = por %p182, %p183
      %s186 = sadd.s32 %s185, 1
      %p189 = scmp.eq.s32.totalorder %s27, 1
      %p190 = scmp.ne.s32.totalorder %s185, %s187
      %p191 = scmp.eq.s32.totalorder %s27, 0
      %p192 = por %p190, %p191
      %p193 = scmp.ne.s32.totalorder %s185, %s187
      %p194 = scmp.eq.s32.totalorder %s32, 1
      %p195 = por %p193, %p194
      %p196 = scmp.ne.s32.totalorder %s187, %s188
      %p197 = scmp.eq.s32.totalorder %s32, 0
      %p198 = por %p196, %p197
      %p199 = scmp.ne.s32.totalorder %s187, %s188
      %p200 = scmp.eq.s32.totalorder %s33, 1
      %p201 = por %p199, %p200
      %p203 = scmp.ne.s32.totalorder %s188, %s202
      %p204 = scmp.eq.s32.totalorder %s33, 0
      %p205 = por %p203, %p204
      %s207 = sadd.s32 %s206, 1
      %p210 = scmp.eq.s32.totalorder %s27, 1
      %p211 = scmp.ne.s32.totalorder %s206, %s208
      %p212 = scmp.eq.s32.totalorder %s27, 0
      %p213 = por %p211, %p212
      %p214 = scmp.ne.s32.totalorder %s206, %s208
      %p215 = scmp.eq.s32.totalorder %s32, 1
      %p216 = por %p214, %p215
      %p217 = scmp.ne.s32.totalorder %s208, %s209
      %p218 = scmp.eq.s32.totalorder %s32, 0
      %p219 = por %p217, %p218
      %p220 = scmp.ne.s32.totalorder %s208, %s209
      %p221 = scmp.eq.s32.totalorder %s33, 1
      %p222 = por %p220, %p221
      %p224 = scmp.ne.s32.totalorder %s209, %s223
      %p225 = scmp.eq.s32.totalorder %s33, 0
      %p226 = por %p224, %p225
      %s228 = sadd.s32 %s227, 1
      %p231 = scmp.eq.s32.totalorder %s27, 1
      %p232 = scmp.ne.s32.totalorder %s227, %s229
      %p233 = scmp.eq.s32.totalorder %s27, 0
      %p234 = por %p232, %p233
      %p235 = scmp.ne.s32.totalorder %s227, %s229
      %p236 = scmp.eq.s32.totalorder %s32, 1
      %p237 = por %p235, %p236
      %p238 = scmp.ne.s32.totalorder %s229, %s230
      %p239 = scmp.eq.s32.totalorder %s32, 0
      %p240 = por %p238, %p239
      %p241 = scmp.ne.s32.totalorder %s229, %s230
      %p242 = scmp.eq.s32.totalorder %s33, 1
      %p243 = por %p241, %p242
      %p245 = scmp.ne.s32.totalorder %s230, %s244
      %p246 = scmp.eq.s32.totalorder %s33, 0
      %p247 = por %p245, %p246
      %s249 = sadd.s32 %s248, 1
      %p252 = scmp.eq.s32.totalorder %s27, 1
      %p253 = scmp.ne.s32.totalorder %s248, %s250
      %p254 = scmp.eq.s32.totalorder %s27, 0
      %p255 = por %p253, %p254
      %p256 = scmp.ne.s32.totalorder %s248, %s250
      %p257 = scmp.eq.s32.totalorder %s32, 1
      %p258 = por %p256, %p257
      %p259 = scmp.ne.s32.totalorder %s250, %s251
      %p260 = scmp.eq.s32.totalorder %s32, 0
      %p261 = por %p259, %p260
      %p262 = scmp.ne.s32.totalorder %s250, %s251
      %p263 = scmp.eq.s32.totalorder %s33, 1
      %p264 = por %p262, %p263
      %p266 = scmp.ne.s32.totalorder %s251, %s265
      %p267 = scmp.eq.s32.totalorder %s33, 0
      %p268 = por %p266, %p267
      %s269 = ssub.s32 %s34, %s46
      %s270 = ssub.s32 %s35, %s42
      %s271 = sor.u32 %s269, %s270
      %p272 = scmp.eq.s32.totalorder %s271, 0
      %s274 = sadd.s32 %s273, 1
      %s275 = scalar_select %p272, %s273, %s274
      %p278 = pneg %p272
      %p279 = scmp.eq.s32.totalorder %s27, 1
      %p280 = por %p278, %p279
      %p281 = scmp.ne.s32.totalorder %s273, %s276
      %p282 = scmp.eq.s32.totalorder %s27, 0
      %p283 = por %p281, %p282
      %p284 = scmp.ne.s32.totalorder %s273, %s276
      %p285 = scmp.eq.s32.totalorder %s32, 1
      %p286 = por %p284, %p285
      %p287 = scmp.ne.s32.totalorder %s276, %s277
      %p288 = scmp.eq.s32.totalorder %s32, 0
      %p289 = por %p287, %p288
      %p290 = scmp.ne.s32.totalorder %s276, %s277
      %p291 = scmp.eq.s32.totalorder %s33, 1
      %p292 = por %p290, %p291
      %p294 = scmp.ne.s32.totalorder %s277, %s293
      %p295 = scmp.eq.s32.totalorder %s33, 0
      %p296 = por %p294, %p295
      %p297 = scmp.le.s32.totalorder 1, %s27
      %p298 = scmp.lt.s32.totalorder %s27, 3
      %p299 = pnand %p297, %p298
      %p300 = pneg %p299
      // Predicated region
      $region9: #{tpu_custom_call.1} parent=5 // pred_check
        _
      $region10: #{tpu_custom_call.1} parent=5 // pred_check_branch
        %302 = sbr.rel (%p299) target = $region12
      $region11: #{tpu_custom_call.1} parent=5 // pred_region
        %s303 = ssub.s32 %s27, 1
        // Predicated region
        $region13: #{tpu_custom_call.1} parent=11 // pred_check
          %p304 = pneg %p114
        $region14: #{tpu_custom_call.1} parent=11 // pred_check_branch
          %306 = sbr.rel (%p304) target = $region16
        $region15: #{tpu_custom_call.1} parent=11 // pred_region
          %s308 = ssub.s32 512, 512
          %309 = vsyncadd [#allocation9], %s308
          %s310 = sshll.u32 [#allocation10], 4
          %s311 = int_to_ptr.vmem [resolvable:$true] %s310
          %316 = dma.hbm_to_vmem [thread:$0]  %s2, 512, %s311, [#allocation9], 128, 128, 8
        $region16: #{tpu_custom_call.1} parent=11 // pred_fallthru
          _
        // Predicated region
        $region17: #{tpu_custom_call.1} parent=11 // pred_check
          %p317 = pneg %p135
        $region18: #{tpu_custom_call.1} parent=11 // pred_check_branch
          %319 = sbr.rel (%p317) target = $region20
        $region19: #{tpu_custom_call.1} parent=11 // pred_region
          %s321 = ssub.s32 512, 512
          %322 = vsyncadd [#allocation12], %s321
          %s323 = sshll.u32 [#allocation11], 4
          %s324 = int_to_ptr.vmem [resolvable:$true] %s323
          %329 = dma.hbm_to_vmem [thread:$0]  %s3, 512, %s324, [#allocation12], 128, 128, 8
        $region20: #{tpu_custom_call.1} parent=11 // pred_fallthru
          _
        // Predicated region
        $region21: #{tpu_custom_call.1} parent=11 // pred_check
          %p330 = pneg %p156
        $region22: #{tpu_custom_call.1} parent=11 // pred_check_branch
          %332 = sbr.rel (%p330) target = $region24
        $region23: #{tpu_custom_call.1} parent=11 // pred_region
          %s334 = ssub.s32 512, 512
          %335 = vsyncadd [#allocation12], %s334
          %s336 = sshll.u32 [#allocation13], 4
          %s337 = int_to_ptr.vmem [resolvable:$true] %s336
          %342 = dma.hbm_to_vmem [thread:$0]  %s4, 512, %s337, [#allocation12], 128, 128, 8
        $region24: #{tpu_custom_call.1} parent=11 // pred_fallthru
          _
        // Predicated region
        $region25: #{tpu_custom_call.1} parent=11 // pred_check
          %p343 = pneg %p177
        $region26: #{tpu_custom_call.1} parent=11 // pred_check_branch
          %345 = sbr.rel (%p343) target = $region28
        $region27: #{tpu_custom_call.1} parent=11 // pred_region
          _
        $region28: #{tpu_custom_call.1} parent=11 // pred_fallthru
          _
        // Predicated region
        $region29: #{tpu_custom_call.1} parent=11 // pred_check
          %p346 = pneg %p198
        $region30: #{tpu_custom_call.1} parent=11 // pred_check_branch
          %348 = sbr.rel (%p346) target = $region32
        $region31: #{tpu_custom_call.1} parent=11 // pred_region
          _
        $region32: #{tpu_custom_call.1} parent=11 // pred_fallthru
          _
        // Predicated region
        $region33: #{tpu_custom_call.1} parent=11 // pred_check
          %p349 = pneg %p219
        $region34: #{tpu_custom_call.1} parent=11 // pred_check_branch
          %351 = sbr.rel (%p349) target = $region36
        $region35: #{tpu_custom_call.1} parent=11 // pred_region
          _
        $region36: #{tpu_custom_call.1} parent=11 // pred_fallthru
          _
        // Predicated region
        $region37: #{tpu_custom_call.1} parent=11 // pred_check
          %p352 = pneg %p240
        $region38: #{tpu_custom_call.1} parent=11 // pred_check_branch
          %354 = sbr.rel (%p352) target = $region40
        $region39: #{tpu_custom_call.1} parent=11 // pred_region
          %s356 = ssub.s32 512, 512
          %357 = vsyncadd [#allocation15], %s356
          %s358 = sshll.u32 [#allocation14], 4
          %s359 = int_to_ptr.vmem [resolvable:$true] %s358
          %364 = dma.hbm_to_vmem [thread:$0]  %s8, 512, %s359, [#allocation15], 128, 128, 8
        $region40: #{tpu_custom_call.1} parent=11 // pred_fallthru
          _
        // Predicated region
        $region41: #{tpu_custom_call.1} parent=11 // pred_check
          %p365 = pneg %p261
        $region42: #{tpu_custom_call.1} parent=11 // pred_check_branch
          %367 = sbr.rel (%p365) target = $region44
        $region43: #{tpu_custom_call.1} parent=11 // pred_region
          _
        $region44: #{tpu_custom_call.1} parent=11 // pred_fallthru
          _
      $region12: #{tpu_custom_call.1} parent=5 // pred_fallthru
        _
      %p368 = scmp.lt.s32.totalorder %s27, 2
      // Predicated region
      $region45: #{tpu_custom_call.1} parent=5 // pred_check
        %p369 = pneg %p368
      $region46: #{tpu_custom_call.1} parent=5 // pred_check_branch
        %371 = sbr.rel (%p369) target = $region48
      $region47: #{tpu_custom_call.1} parent=5 // pred_region
        // Predicated region
        $region49: #{tpu_custom_call.1} parent=47 // pred_check
          %p372 = pneg %p61
        $region50: #{tpu_custom_call.1} parent=47 // pred_check_branch
          %374 = sbr.rel (%p372) target = $region52
        $region51: #{tpu_custom_call.1} parent=47 // pred_region
          %s375 = sand.u32 %s51, 1
          %s376 = scalar_lea.sflag [#allocation6], %s375
          %s377 = sand.u32 %s51, 1
          %s378 = smul.addr %s377, 8
          %s379 = scalar_lea.vmem [#allocation5], %s378
          %s381 = ssub.s32 128, 128
          %382 = vsyncadd %s376, %s381
          %s383 = sadd.s32 %s35, %s34
          %s384 = smul.addr %s383, 128
          %s385 = scalar_lea.hbm %s0, %s384
          %s387 = sshll.u32 %s379, 4
          %s388 = int_to_ptr.vmem [resolvable:$true] %s387
          %390 = dma.hbm_to_vmem [thread:$0]  %s385, 128, %s388, %s376
        $region52: #{tpu_custom_call.1} parent=47 // pred_fallthru
          _
        // Predicated region
        $region53: #{tpu_custom_call.1} parent=47 // pred_check
          %p391 = pneg %p87
        $region54: #{tpu_custom_call.1} parent=47 // pred_check_branch
          %393 = sbr.rel (%p391) target = $region56
        $region55: #{tpu_custom_call.1} parent=47 // pred_region
          %s394 = sand.u32 %s27, 1
          %s395 = scalar_lea.sflag [#allocation9], %s394
          %s396 = sand.u32 %s77, 1
          %s397 = smul.addr %s396, 8
          %s398 = scalar_lea.vmem [#allocation8], %s397
          %s400 = ssub.s32 128, 128
          %401 = vsyncadd %s395, %s400
          %s402 = smul.addr %s34, 128
          %s403 = scalar_lea.hbm %s1, %s402
          %s405 = sshll.u32 %s398, 4
          %s406 = int_to_ptr.vmem [resolvable:$true] %s405
          %408 = dma.hbm_to_vmem [thread:$0]  %s403, 128, %s406, %s395
        $region56: #{tpu_custom_call.1} parent=47 // pred_fallthru
          _
      $region48: #{tpu_custom_call.1} parent=5 // pred_fallthru
        _
      %p409 = scmp.le.s32.totalorder 1, %s27
      %p410 = scmp.lt.s32.totalorder %s27, 3
      %p411 = pnand %p409, %p410
      %p412 = pneg %p411
      // Predicated region
      $region57: #{tpu_custom_call.1} parent=5 // pred_check
        _
      $region58: #{tpu_custom_call.1} parent=5 // pred_check_branch
        %414 = sbr.rel (%p411) target = $region60
      $region59: #{tpu_custom_call.1} parent=5 // pred_region
        %s415 = ssub.s32 %s27, 1
        %s416 = sand.u32 %s54, 1
        %s417 = scalar_lea.sflag [#allocation6], %s416
        %s418 = sand.u32 %s54, 1
        %s419 = smul.addr %s418, 8
        %s420 = scalar_lea.vmem [#allocation5], %s419
        // Predicated region
        $region61: #{tpu_custom_call.1} parent=59 // pred_check
          %p421 = pneg %p67
        $region62: #{tpu_custom_call.1} parent=59 // pred_check_branch
          %423 = sbr.rel (%p421) target = $region64
        $region63: #{tpu_custom_call.1} parent=59 // pred_region
          %424 = dma.done %s417, 128
        $region64: #{tpu_custom_call.1} parent=59 // pred_fallthru
          _
        %s425 = sand.u32 %s32, 1
        %s426 = scalar_lea.sflag [#allocation9], %s425
        %s427 = sand.u32 %s80, 1
        %s428 = smul.addr %s427, 8
        %s429 = scalar_lea.vmem [#allocation8], %s428
        // Predicated region
        $region65: #{tpu_custom_call.1} parent=59 // pred_check
          %p430 = pneg %p93
        $region66: #{tpu_custom_call.1} parent=59 // pred_check_branch
          %432 = sbr.rel (%p430) target = $region68
        $region67: #{tpu_custom_call.1} parent=59 // pred_region
          %433 = dma.done %s426, 128
        $region68: #{tpu_custom_call.1} parent=59 // pred_fallthru
          _
        // Predicated region
        $region69: #{tpu_custom_call.1} parent=59 // pred_check
          %p434 = pneg %p114
        $region70: #{tpu_custom_call.1} parent=59 // pred_check_branch
          %436 = sbr.rel (%p434) target = $region72
        $region71: #{tpu_custom_call.1} parent=59 // pred_region
          %437 = dma.done [#allocation9], 512
        $region72: #{tpu_custom_call.1} parent=59 // pred_fallthru
          _
        // Predicated region
        $region73: #{tpu_custom_call.1} parent=59 // pred_check
          %p438 = pneg %p135
        $region74: #{tpu_custom_call.1} parent=59 // pred_check_branch
          %440 = sbr.rel (%p438) target = $region76
        $region75: #{tpu_custom_call.1} parent=59 // pred_region
          %441 = dma.done [#allocation12], 512
        $region76: #{tpu_custom_call.1} parent=59 // pred_fallthru
          _
        // Predicated region
        $region77: #{tpu_custom_call.1} parent=59 // pred_check
          %p442 = pneg %p156
        $region78: #{tpu_custom_call.1} parent=59 // pred_check_branch
          %444 = sbr.rel (%p442) target = $region80
        $region79: #{tpu_custom_call.1} parent=59 // pred_region
          %445 = dma.done [#allocation12], 512
        $region80: #{tpu_custom_call.1} parent=59 // pred_fallthru
          _
        // Predicated region
        $region81: #{tpu_custom_call.1} parent=59 // pred_check
          %p446 = pneg %p240
        $region82: #{tpu_custom_call.1} parent=59 // pred_check_branch
          %448 = sbr.rel (%p446) target = $region84
        $region83: #{tpu_custom_call.1} parent=59 // pred_region
          %449 = dma.done [#allocation15], 512
        $region84: #{tpu_custom_call.1} parent=59 // pred_fallthru
          _
        %s450 = sand.u32 %s54, 1
        %s451 = scalar_lea.sflag [#allocation6], %s450
        %s452 = sand.u32 %s54, 1
        %s453 = smul.addr %s452, 8
        %s454 = scalar_lea.vmem [#allocation5], %s453
        %p455 = pneg %p67
        %p456 = pneg %p64
        %s457 = sand.u32 %s32, 1
        %s458 = scalar_lea.sflag [#allocation9], %s457
        %s459 = sand.u32 %s80, 1
        %s460 = smul.addr %s459, 8
        %s461 = scalar_lea.vmem [#allocation8], %s460
        %p462 = pneg %p93
        %p463 = pneg %p90
        %p464 = pneg %p114
        %p465 = pneg %p111
        %p466 = pneg %p135
        %p467 = pneg %p132
        %p468 = pneg %p156
        %p469 = pneg %p153
        %p470 = pneg %p177
        %p471 = pneg %p174
        %p472 = pneg %p198
        %p473 = pneg %p195
        %p474 = pneg %p219
        %p475 = pneg %p216
        %p476 = pneg %p240
        %p477 = pneg %p237
        %p478 = pneg %p261
        %p479 = pneg %p258
        %p480 = pneg %p289
        %p481 = pneg %p286
        %s482 = sand.u32 %s276, 1
        %s483 = scalar_lea.sflag [#allocation7], %s482
        %s484 = sand.u32 %s276, 1
        %s485 = smul.addr %s484, 8
        %s486 = scalar_lea.vmem [#allocation16], %s485
        %p487 = scmp.eq.s32.totalorder %s37, 0
        // Predicated region
        $region85: #{tpu_custom_call.1} parent=59 // pred_check
          %p488 = pneg %p487
        $region86: #{tpu_custom_call.1} parent=59 // pred_check_branch
          %490 = sbr.rel (%p488) target = $region88
        $region87: #{tpu_custom_call.1} parent=59 // pred_region
          %v491 = vld [vmem:[%s429] sm:$0xff]
          %v492 = vld [vmem:[#allocation11] sm:$0xff]
          %v493 = vld [vmem:[#allocation11 + $0x8] sm:$0xff]
          %v494 = vld [vmem:[#allocation11 + $0x10] sm:$0xff]
          %v495 = vld [vmem:[#allocation11 + $0x18] sm:$0xff]
          %v496 = vld [vmem:[%s6] sm:$0x1]
          %v498 = vlaneseq
          %v499 = vshrl.u32 %v498, 7
          %v500 = vsub.s32 0, %v499
          %v501 = vrot.slane %v496, %v500
          %vm503 = vcmask 261120
          %v505 = vsel %vm503, %v491, 0
          %507 = vmatprep.subr.mxu0 0.0
          %508 = vmatpush1.msra.mxu0 %v492
          %509 = vmatprep.subr.mxu0 0.0
          %510 = vmatpush1.msra.mxu0 %v493
          %511 = vmatprep.subr.mxu0 0.0
          %512 = vmatpush1.msra.mxu0 %v494
          %513 = vmatprep.subr.mxu0 0.0
          %514 = vmatpush1.msra.mxu0 %v495
          %515 = vmatprep.subr.mxu0 0.0
          %516 = vmatpush1.msra.mxu0 0.0
          %517 = vmatprep.subr.mxu0 0.0
          %518 = vmatpush1.msra.mxu0 0.0
          %519 = vmatprep.subr.mxu0 0.0
          %520 = vmatpush1.msra.mxu0 0.0
          %521 = vmatprep.subr.mxu0 0.0
          %522 = vmatpush1.msra.mxu0 0.0
          %523 = vmatprep.subr.mxu0 0.0
          %524 = vmatpush1.msra.mxu0 0.0
          %525 = vmatprep.subr.mxu0 0.0
          %526 = vmatpush1.msra.mxu0 0.0
          %527 = vmatprep.subr.mxu0 0.0
          %528 = vmatpush1.msra.mxu0 0.0
          %529 = vmatprep.subr.mxu0 0.0
          %530 = vmatpush1.msra.mxu0 0.0
          %531 = vmatprep.subr.mxu0 0.0
          %532 = vmatpush1.msra.mxu0 0.0
          %533 = vmatprep.subr.mxu0 0.0
          %534 = vmatpush1.msra.mxu0 0.0
          %535 = vmatprep.subr.mxu0 0.0
          %536 = vmatpush1.msra.mxu0 0.0
          %537 = vmatprep.subr.mxu0 0.0
          %538 = vmatpush1.msra.mxu0 0.0
          %539 = vmatprep.subr.mxu0 0.0
          %540 = vmatpush1.msra.mxu0 0.0
          %541 = vmatprep.subr.mxu0 0.0
          %542 = vmatpush1.msra.mxu0 0.0
          %543 = vmatprep.subr.mxu0 0.0
          %544 = vmatpush1.msra.mxu0 0.0
          %545 = vmatprep.subr.mxu0 0.0
          %546 = vmatpush1.msra.mxu0 0.0
          %547 = vmatprep.subr.mxu0 0.0
          %548 = vmatpush1.msra.mxu0 0.0
          %549 = vmatprep.subr.mxu0 0.0
          %550 = vmatpush1.msra.mxu0 0.0
          %551 = vmatprep.subr.mxu0 0.0
          %552 = vmatpush1.msra.mxu0 0.0
          %553 = vmatprep.subr.mxu0 0.0
          %554 = vmatpush1.msra.mxu0 0.0
          %555 = vmatprep.subr.mxu0 0.0
          %556 = vmatpush1.msra.mxu0 0.0
          %557 = vmatprep.subr.mxu0 0.0
          %558 = vmatpush1.msra.mxu0 0.0
          %559 = vmatprep.subr.mxu0 0.0
          %560 = vmatpush1.msra.mxu0 0.0
          %561 = vmatprep.subr.mxu0 0.0
          %562 = vmatpush1.msra.mxu0 0.0
          %563 = vmatprep.subr.mxu0 0.0
          %564 = vmatpush1.msra.mxu0 0.0
          %565 = vmatprep.subr.mxu0 0.0
          %566 = vmatpush1.msra.mxu0 0.0
          %567 = vmatprep.subr.mxu0 0.0
          %568 = vmatpush1.msra.mxu0 0.0
          %569 = vmatprep.subr.mxu0 0.0
          %570 = vmatpush1.msra.mxu0 0.0
          %571 = vmatprep.mubr.f32.mxu0 0.0
          %572 = vmatmul.mubr.f32.gmra.mrb[0].mxu0 %v505
          %v573 = vpop.f32.mrb[0].mxu0
          %v574 = vadd.f32 %v501, %v573
          %v575 = vpop.f32.mrb[0].mxu0
          %576 = vdwg.mxu0
          %v577 = vld [vmem:[#allocation13] sm:$0xff]
          %v578 = vld [vmem:[#allocation13 + $0x8] sm:$0xff]
          %v579 = vld [vmem:[#allocation13 + $0x10] sm:$0xff]
          %v580 = vld [vmem:[#allocation13 + $0x18] sm:$0xff]
          %v581 = vld [vmem:[%s7] sm:$0x1]
          %v583 = vlaneseq
          %v584 = vshrl.u32 %v583, 7
          %v585 = vsub.s32 0, %v584
          %v586 = vrot.slane %v581, %v585
          %588 = vmatprep.subr.mxu0 0.0
          %589 = vmatpush1.msra.mxu0 %v577
          %590 = vmatprep.subr.mxu0 0.0
          %591 = vmatpush1.msra.mxu0 %v578
          %592 = vmatprep.subr.mxu0 0.0
          %593 = vmatpush1.msra.mxu0 %v579
          %594 = vmatprep.subr.mxu0 0.0
          %595 = vmatpush1.msra.mxu0 %v580
          %596 = vmatprep.subr.mxu0 0.0
          %597 = vmatpush1.msra.mxu0 0.0
          %598 = vmatprep.subr.mxu0 0.0
          %599 = vmatpush1.msra.mxu0 0.0
          %600 = vmatprep.subr.mxu0 0.0
          %601 = vmatpush1.msra.mxu0 0.0
          %602 = vmatprep.subr.mxu0 0.0
          %603 = vmatpush1.msra.mxu0 0.0
          %604 = vmatprep.subr.mxu0 0.0
          %605 = vmatpush1.msra.mxu0 0.0
          %606 = vmatprep.subr.mxu0 0.0
          %607 = vmatpush1.msra.mxu0 0.0
          %608 = vmatprep.subr.mxu0 0.0
          %609 = vmatpush1.msra.mxu0 0.0
          %610 = vmatprep.subr.mxu0 0.0
          %611 = vmatpush1.msra.mxu0 0.0
          %612 = vmatprep.subr.mxu0 0.0
          %613 = vmatpush1.msra.mxu0 0.0
          %614 = vmatprep.subr.mxu0 0.0
          %615 = vmatpush1.msra.mxu0 0.0
          %616 = vmatprep.subr.mxu0 0.0
          %617 = vmatpush1.msra.mxu0 0.0
          %618 = vmatprep.subr.mxu0 0.0
          %619 = vmatpush1.msra.mxu0 0.0
          %620 = vmatprep.subr.mxu0 0.0
          %621 = vmatpush1.msra.mxu0 0.0
          %622 = vmatprep.subr.mxu0 0.0
          %623 = vmatpush1.msra.mxu0 0.0
          %624 = vmatprep.subr.mxu0 0.0
          %625 = vmatpush1.msra.mxu0 0.0
          %626 = vmatprep.subr.mxu0 0.0
          %627 = vmatpush1.msra.mxu0 0.0
          %628 = vmatprep.subr.mxu0 0.0
          %629 = vmatpush1.msra.mxu0 0.0
          %630 = vmatprep.subr.mxu0 0.0
          %631 = vmatpush1.msra.mxu0 0.0
          %632 = vmatprep.subr.mxu0 0.0
          %633 = vmatpush1.msra.mxu0 0.0
          %634 = vmatprep.subr.mxu0 0.0
          %635 = vmatpush1.msra.mxu0 0.0
          %636 = vmatprep.subr.mxu0 0.0
          %637 = vmatpush1.msra.mxu0 0.0
          %638 = vmatprep.subr.mxu0 0.0
          %639 = vmatpush1.msra.mxu0 0.0
          %640 = vmatprep.subr.mxu0 0.0
          %641 = vmatpush1.msra.mxu0 0.0
          %642 = vmatprep.subr.mxu0 0.0
          %643 = vmatpush1.msra.mxu0 0.0
          %644 = vmatprep.subr.mxu0 0.0
          %645 = vmatpush1.msra.mxu0 0.0
          %646 = vmatprep.subr.mxu0 0.0
          %647 = vmatpush1.msra.mxu0 0.0
          %648 = vmatprep.subr.mxu0 0.0
          %649 = vmatpush1.msra.mxu0 0.0
          %650 = vmatprep.subr.mxu0 0.0
          %651 = vmatpush1.msra.mxu0 0.0
          %652 = vmatprep.mubr.f32.mxu0 0.0
          %653 = vmatmul.mubr.f32.gmra.mrb[0].mxu0 %v505
          %v654 = vpop.f32.mrb[0].mxu0
          %v655 = vadd.f32 %v586, %v654
          %v656 = vpop.f32.mrb[0].mxu0
          %657 = vdwg.mxu0
          %658 = vst.msk [vmem:[#allocation2] sm:$0xff] %vm503, %v574
          %659 = vst.msk [vmem:[#allocation3] sm:$0xff] %vm503, %v655
        $region88: #{tpu_custom_call.1} parent=59 // pred_fallthru
          _
        %v660 = vld [vmem:[%s420] sm:$0xff]
        %v661 = vld [vmem:[#allocation10] sm:$0xff]
        %v662 = vld [vmem:[#allocation10 + $0x8] sm:$0xff]
        %v663 = vld [vmem:[#allocation10 + $0x10] sm:$0xff]
        %v664 = vld [vmem:[#allocation10 + $0x18] sm:$0xff]
        %v665 = vld [vmem:[%s5] sm:$0x1]
        %v667 = vlaneseq
        %v668 = vshrl.u32 %v667, 7
        %v669 = vsub.s32 0, %v668
        %v670 = vrot.slane %v665, %v669
        %vm672 = vcmask 261120
        %v674 = vsel %vm672, %v660, 0
        %676 = vmatprep.subr.mxu0 0.0
        %677 = vmatpush1.msra.mxu0 %v661
        %678 = vmatprep.subr.mxu0 0.0
        %679 = vmatpush1.msra.mxu0 %v662
        %680 = vmatprep.subr.mxu0 0.0
        %681 = vmatpush1.msra.mxu0 %v663
        %682 = vmatprep.subr.mxu0 0.0
        %683 = vmatpush1.msra.mxu0 %v664
        %684 = vmatprep.subr.mxu0 0.0
        %685 = vmatpush1.msra.mxu0 0.0
        %686 = vmatprep.subr.mxu0 0.0
        %687 = vmatpush1.msra.mxu0 0.0
        %688 = vmatprep.subr.mxu0 0.0
        %689 = vmatpush1.msra.mxu0 0.0
        %690 = vmatprep.subr.mxu0 0.0
        %691 = vmatpush1.msra.mxu0 0.0
        %692 = vmatprep.subr.mxu0 0.0
        %693 = vmatpush1.msra.mxu0 0.0
        %694 = vmatprep.subr.mxu0 0.0
        %695 = vmatpush1.msra.mxu0 0.0
        %696 = vmatprep.subr.mxu0 0.0
        %697 = vmatpush1.msra.mxu0 0.0
        %698 = vmatprep.subr.mxu0 0.0
        %699 = vmatpush1.msra.mxu0 0.0
        %700 = vmatprep.subr.mxu0 0.0
        %701 = vmatpush1.msra.mxu0 0.0
        %702 = vmatprep.subr.mxu0 0.0
        %703 = vmatpush1.msra.mxu0 0.0
        %704 = vmatprep.subr.mxu0 0.0
        %705 = vmatpush1.msra.mxu0 0.0
        %706 = vmatprep.subr.mxu0 0.0
        %707 = vmatpush1.msra.mxu0 0.0
        %708 = vmatprep.subr.mxu0 0.0
        %709 = vmatpush1.msra.mxu0 0.0
        %710 = vmatprep.subr.mxu0 0.0
        %711 = vmatpush1.msra.mxu0 0.0
        %712 = vmatprep.subr.mxu0 0.0
        %713 = vmatpush1.msra.mxu0 0.0
        %714 = vmatprep.subr.mxu0 0.0
        %715 = vmatpush1.msra.mxu0 0.0
        %716 = vmatprep.subr.mxu0 0.0
        %717 = vmatpush1.msra.mxu0 0.0
        %718 = vmatprep.subr.mxu0 0.0
        %719 = vmatpush1.msra.mxu0 0.0
        %720 = vmatprep.subr.mxu0 0.0
        %721 = vmatpush1.msra.mxu0 0.0
        %722 = vmatprep.subr.mxu0 0.0
        %723 = vmatpush1.msra.mxu0 0.0
        %724 = vmatprep.subr.mxu0 0.0
        %725 = vmatpush1.msra.mxu0 0.0
        %726 = vmatprep.subr.mxu0 0.0
        %727 = vmatpush1.msra.mxu0 0.0
        %728 = vmatprep.subr.mxu0 0.0
        %729 = vmatpush1.msra.mxu0 0.0
        %730 = vmatprep.subr.mxu0 0.0
        %731 = vmatpush1.msra.mxu0 0.0
        %732 = vmatprep.subr.mxu0 0.0
        %733 = vmatpush1.msra.mxu0 0.0
        %734 = vmatprep.subr.mxu0 0.0
        %735 = vmatpush1.msra.mxu0 0.0
        %736 = vmatprep.subr.mxu0 0.0
        %737 = vmatpush1.msra.mxu0 0.0
        %738 = vmatprep.subr.mxu0 0.0
        %739 = vmatpush1.msra.mxu0 0.0
        %740 = vmatprep.mubr.f32.mxu0 0.0
        %741 = vmatmul.mubr.f32.gmra.mrb[0].mxu0 %v674
        %v742 = vpop.f32.mrb[0].mxu0
        %v743 = vadd.f32 %v670, %v742
        %v744 = vpop.f32.mrb[0].mxu0
        %745 = vdwg.mxu0
        %v746 = vld [vmem:[#allocation2] sm:$0xff]
        %v747 = vld [vmem:[#allocation3] sm:$0xff]
        %vm748 = vcmask 64512
        %v750 = vsel %vm748, %v743, 0
        %v753 = vsel %vm748, %v746, 0
        %755 = vmatprep.subr.mxu0 0.0
        %756 = vmatpush1.xpose.msra.mxu0 %v753
        %757 = vmatprep.subr.mxu0 0.0
        %758 = vmatpush1.xpose.msra.mxu0 0.0
        %759 = vmatprep.subr.mxu0 0.0
        %760 = vmatpush1.xpose.msra.mxu0 0.0
        %761 = vmatprep.subr.mxu0 0.0
        %762 = vmatpush1.xpose.msra.mxu0 0.0
        %763 = vmatprep.subr.mxu0 0.0
        %764 = vmatpush1.xpose.msra.mxu0 0.0
        %765 = vmatprep.subr.mxu0 0.0
        %766 = vmatpush1.xpose.msra.mxu0 0.0
        %767 = vmatprep.subr.mxu0 0.0
        %768 = vmatpush1.xpose.msra.mxu0 0.0
        %769 = vmatprep.subr.mxu0 0.0
        %770 = vmatpush1.xpose.msra.mxu0 0.0
        %771 = vmatprep.subr.mxu0 0.0
        %772 = vmatpush1.xpose.msra.mxu0 0.0
        %773 = vmatprep.subr.mxu0 0.0
        %774 = vmatpush1.xpose.msra.mxu0 0.0
        %775 = vmatprep.subr.mxu0 0.0
        %776 = vmatpush1.xpose.msra.mxu0 0.0
        %777 = vmatprep.subr.mxu0 0.0
        %778 = vmatpush1.xpose.msra.mxu0 0.0
        %779 = vmatprep.subr.mxu0 0.0
        %780 = vmatpush1.xpose.msra.mxu0 0.0
        %781 = vmatprep.subr.mxu0 0.0
        %782 = vmatpush1.xpose.msra.mxu0 0.0
        %783 = vmatprep.subr.mxu0 0.0
        %784 = vmatpush1.xpose.msra.mxu0 0.0
        %785 = vmatprep.subr.mxu0 0.0
        %786 = vmatpush1.xpose.msra.mxu0 0.0
        %787 = vmatprep.subr.mxu0 0.0
        %788 = vmatpush1.xpose.msra.mxu0 0.0
        %789 = vmatprep.subr.mxu0 0.0
        %790 = vmatpush1.xpose.msra.mxu0 0.0
        %791 = vmatprep.subr.mxu0 0.0
        %792 = vmatpush1.xpose.msra.mxu0 0.0
        %793 = vmatprep.subr.mxu0 0.0
        %794 = vmatpush1.xpose.msra.mxu0 0.0
        %795 = vmatprep.subr.mxu0 0.0
        %796 = vmatpush1.xpose.msra.mxu0 0.0
        %797 = vmatprep.subr.mxu0 0.0
        %798 = vmatpush1.xpose.msra.mxu0 0.0
        %799 = vmatprep.subr.mxu0 0.0
        %800 = vmatpush1.xpose.msra.mxu0 0.0
        %801 = vmatprep.subr.mxu0 0.0
        %802 = vmatpush1.xpose.msra.mxu0 0.0
        %803 = vmatprep.subr.mxu0 0.0
        %804 = vmatpush1.xpose.msra.mxu0 0.0
        %805 = vmatprep.subr.mxu0 0.0
        %806 = vmatpush1.xpose.msra.mxu0 0.0
        %807 = vmatprep.subr.mxu0 0.0
        %808 = vmatpush1.xpose.msra.mxu0 0.0
        %809 = vmatprep.subr.mxu0 0.0
        %810 = vmatpush1.xpose.msra.mxu0 0.0
        %811 = vmatprep.subr.mxu0 0.0
        %812 = vmatpush1.xpose.msra.mxu0 0.0
        %813 = vmatprep.subr.mxu0 0.0
        %814 = vmatpush1.xpose.msra.mxu0 0.0
        %815 = vmatprep.subr.mxu0 0.0
        %816 = vmatpush1.xpose.msra.mxu0 0.0
        %817 = vmatprep.subr.mxu0 0.0
        %818 = vmatpush1.xpose.msra.mxu0 0.0
        %819 = vmatprep.mubr.f32.mxu0 0.0
        %820 = vmatmul.mubr.f32.gmra.mrb[0].mxu0 %v750
        %v821 = vpop.f32.mrb[0].mxu0
        %v822 = vadd.f32 0.0, %v821
        %v823 = vpop.f32.mrb[0].mxu0
        %824 = vdwg.mxu0
        %v825 = vsel %vm748, %v822, -inf
        %826 = vmax.xlane.f32.xlu0 %v825
        %v827 = vpop.xlane.xlu0 %826
        %v828 = vsub.f32 %v822, %v827
        %v829 = vmul.f32 %v828, 1.442695
        %v830 = vpow.pop %v829
        %v831 = vsel %vm748, %v830, 0.0
        %832 = vadd.xlane.f32.xlu0 %v831
        %v833 = vpop.xlane.xlu0 %832
        %v834 = vrcp.pop %v833
        %v835 = vmul.f32 %v830, %v834
        %v837 = vsel %vm748, %v835, 0
        %839 = vmatprep.subr.mxu0 0.0
        %840 = vmatpush1.msra.mxu0 %v747
        %841 = vmatprep.subr.mxu0 0.0
        %842 = vmatpush1.msra.mxu0 0.0
        %843 = vmatprep.subr.mxu0 0.0
        %844 = vmatpush1.msra.mxu0 0.0
        %845 = vmatprep.subr.mxu0 0.0
        %846 = vmatpush1.msra.mxu0 0.0
        %847 = vmatprep.subr.mxu0 0.0
        %848 = vmatpush1.msra.mxu0 0.0
        %849 = vmatprep.subr.mxu0 0.0
        %850 = vmatpush1.msra.mxu0 0.0
        %851 = vmatprep.subr.mxu0 0.0
        %852 = vmatpush1.msra.mxu0 0.0
        %853 = vmatprep.subr.mxu0 0.0
        %854 = vmatpush1.msra.mxu0 0.0
        %855 = vmatprep.subr.mxu0 0.0
        %856 = vmatpush1.msra.mxu0 0.0
        %857 = vmatprep.subr.mxu0 0.0
        %858 = vmatpush1.msra.mxu0 0.0
        %859 = vmatprep.subr.mxu0 0.0
        %860 = vmatpush1.msra.mxu0 0.0
        %861 = vmatprep.subr.mxu0 0.0
        %862 = vmatpush1.msra.mxu0 0.0
        %863 = vmatprep.subr.mxu0 0.0
        %864 = vmatpush1.msra.mxu0 0.0
        %865 = vmatprep.subr.mxu0 0.0
        %866 = vmatpush1.msra.mxu0 0.0
        %867 = vmatprep.subr.mxu0 0.0
        %868 = vmatpush1.msra.mxu0 0.0
        %869 = vmatprep.subr.mxu0 0.0
        %870 = vmatpush1.msra.mxu0 0.0
        %871 = vmatprep.subr.mxu0 0.0
        %872 = vmatpush1.msra.mxu0 0.0
        %873 = vmatprep.subr.mxu0 0.0
        %874 = vmatpush1.msra.mxu0 0.0
        %875 = vmatprep.subr.mxu0 0.0
        %876 = vmatpush1.msra.mxu0 0.0
        %877 = vmatprep.subr.mxu0 0.0
        %878 = vmatpush1.msra.mxu0 0.0
        %879 = vmatprep.subr.mxu0 0.0
        %880 = vmatpush1.msra.mxu0 0.0
        %881 = vmatprep.subr.mxu0 0.0
        %882 = vmatpush1.msra.mxu0 0.0
        %883 = vmatprep.subr.mxu0 0.0
        %884 = vmatpush1.msra.mxu0 0.0
        %885 = vmatprep.subr.mxu0 0.0
        %886 = vmatpush1.msra.mxu0 0.0
        %887 = vmatprep.subr.mxu0 0.0
        %888 = vmatpush1.msra.mxu0 0.0
        %889 = vmatprep.subr.mxu0 0.0
        %890 = vmatpush1.msra.mxu0 0.0
        %891 = vmatprep.subr.mxu0 0.0
        %892 = vmatpush1.msra.mxu0 0.0
        %893 = vmatprep.subr.mxu0 0.0
        %894 = vmatpush1.msra.mxu0 0.0
        %895 = vmatprep.subr.mxu0 0.0
        %896 = vmatpush1.msra.mxu0 0.0
        %897 = vmatprep.subr.mxu0 0.0
        %898 = vmatpush1.msra.mxu0 0.0
        %899 = vmatprep.subr.mxu0 0.0
        %900 = vmatpush1.msra.mxu0 0.0
        %901 = vmatprep.subr.mxu0 0.0
        %902 = vmatpush1.msra.mxu0 0.0
        %903 = vmatprep.mubr.f32.mxu0 0.0
        %904 = vmatmul.mubr.f32.gmra.mrb[0].mxu0 %v837
        %v905 = vpop.f32.mrb[0].mxu0
        %v906 = vadd.f32 0.0, %v905
        %v907 = vpop.f32.mrb[0].mxu0
        %908 = vdwg.mxu0
        %909 = vst.msk [vmem:[#allocation4] sm:$0xff] %vm748, %v906
        %v910 = vld [vmem:[#allocation2] sm:$0xff]
        %v911 = vld [vmem:[#allocation3] sm:$0xff]
        %912 = vrot.lane.b32.xlu0 %v743, 120
        %v913 = vpop.permute.xlu0 %912
        %915 = vrot.lane.b32.xlu0 %v910, 120
        %v916 = vpop.permute.xlu0 %915
        %v917 = vsel %vm748, %v913, 0
        %v919 = vsel %vm748, %v916, 0
        %921 = vmatprep.subr.mxu0 0.0
        %922 = vmatpush1.xpose.msra.mxu0 %v919
        %923 = vmatprep.subr.mxu0 0.0
        %924 = vmatpush1.xpose.msra.mxu0 0.0
        %925 = vmatprep.subr.mxu0 0.0
        %926 = vmatpush1.xpose.msra.mxu0 0.0
        %927 = vmatprep.subr.mxu0 0.0
        %928 = vmatpush1.xpose.msra.mxu0 0.0
        %929 = vmatprep.subr.mxu0 0.0
        %930 = vmatpush1.xpose.msra.mxu0 0.0
        %931 = vmatprep.subr.mxu0 0.0
        %932 = vmatpush1.xpose.msra.mxu0 0.0
        %933 = vmatprep.subr.mxu0 0.0
        %934 = vmatpush1.xpose.msra.mxu0 0.0
        %935 = vmatprep.subr.mxu0 0.0
        %936 = vmatpush1.xpose.msra.mxu0 0.0
        %937 = vmatprep.subr.mxu0 0.0
        %938 = vmatpush1.xpose.msra.mxu0 0.0
        %939 = vmatprep.subr.mxu0 0.0
        %940 = vmatpush1.xpose.msra.mxu0 0.0
        %941 = vmatprep.subr.mxu0 0.0
        %942 = vmatpush1.xpose.msra.mxu0 0.0
        %943 = vmatprep.subr.mxu0 0.0
        %944 = vmatpush1.xpose.msra.mxu0 0.0
        %945 = vmatprep.subr.mxu0 0.0
        %946 = vmatpush1.xpose.msra.mxu0 0.0
        %947 = vmatprep.subr.mxu0 0.0
        %948 = vmatpush1.xpose.msra.mxu0 0.0
        %949 = vmatprep.subr.mxu0 0.0
        %950 = vmatpush1.xpose.msra.mxu0 0.0
        %951 = vmatprep.subr.mxu0 0.0
        %952 = vmatpush1.xpose.msra.mxu0 0.0
        %953 = vmatprep.subr.mxu0 0.0
        %954 = vmatpush1.xpose.msra.mxu0 0.0
        %955 = vmatprep.subr.mxu0 0.0
        %956 = vmatpush1.xpose.msra.mxu0 0.0
        %957 = vmatprep.subr.mxu0 0.0
        %958 = vmatpush1.xpose.msra.mxu0 0.0
        %959 = vmatprep.subr.mxu0 0.0
        %960 = vmatpush1.xpose.msra.mxu0 0.0
        %961 = vmatprep.subr.mxu0 0.0
        %962 = vmatpush1.xpose.msra.mxu0 0.0
        %963 = vmatprep.subr.mxu0 0.0
        %964 = vmatpush1.xpose.msra.mxu0 0.0
        %965 = vmatprep.subr.mxu0 0.0
        %966 = vmatpush1.xpose.msra.mxu0 0.0
        %967 = vmatprep.subr.mxu0 0.0
        %968 = vmatpush1.xpose.msra.mxu0 0.0
        %969 = vmatprep.subr.mxu0 0.0
        %970 = vmatpush1.xpose.msra.mxu0 0.0
        %971 = vmatprep.subr.mxu0 0.0
        %972 = vmatpush1.xpose.msra.mxu0 0.0
        %973 = vmatprep.subr.mxu0 0.0
        %974 = vmatpush1.xpose.msra.mxu0 0.0
        %975 = vmatprep.subr.mxu0 0.0
        %976 = vmatpush1.xpose.msra.mxu0 0.0
        %977 = vmatprep.subr.mxu0 0.0
        %978 = vmatpush1.xpose.msra.mxu0 0.0
        %979 = vmatprep.subr.mxu0 0.0
        %980 = vmatpush1.xpose.msra.mxu0 0.0
        %981 = vmatprep.subr.mxu0 0.0
        %982 = vmatpush1.xpose.msra.mxu0 0.0
        %983 = vmatprep.subr.mxu0 0.0
        %984 = vmatpush1.xpose.msra.mxu0 0.0
        %985 = vmatprep.mubr.f32.mxu0 0.0
        %986 = vmatmul.mubr.f32.gmra.mrb[0].mxu0 %v917
        %v987 = vpop.f32.mrb[0].mxu0
        %v988 = vadd.f32 0.0, %v987
        %v989 = vpop.f32.mrb[0].mxu0
        %990 = vdwg.mxu0
        %v991 = vsel %vm748, %v988, -inf
        %992 = vmax.xlane.f32.xlu0 %v991
        %v993 = vpop.xlane.xlu0 %992
        %v994 = vsub.f32 %v988, %v993
        %v995 = vmul.f32 %v994, 1.442695
        %v996 = vpow.pop %v995
        %v997 = vsel %vm748, %v996, 0.0
        %998 = vadd.xlane.f32.xlu0 %v997
        %v999 = vpop.xlane.xlu0 %998
        %v1000 = vrcp.pop %v999
        %v1001 = vmul.f32 %v996, %v1000
        %1003 = vrot.lane.b32.xlu0 %v911, 120
        %v1004 = vpop.permute.xlu0 %1003
        %v1007 = vsel %vm748, %v1001, 0
        %1009 = vmatprep.subr.mxu0 0.0
        %1010 = vmatpush1.msra.mxu0 %v1004
        %1011 = vmatprep.subr.mxu0 0.0
        %1012 = vmatpush1.msra.mxu0 0.0
        %1013 = vmatprep.subr.mxu0 0.0
        %1014 = vmatpush1.msra.mxu0 0.0
        %1015 = vmatprep.subr.mxu0 0.0
        %1016 = vmatpush1.msra.mxu0 0.0
        %1017 = vmatprep.subr.mxu0 0.0
        %1018 = vmatpush1.msra.mxu0 0.0
        %1019 = vmatprep.subr.mxu0 0.0
        %1020 = vmatpush1.msra.mxu0 0.0
        %1021 = vmatprep.subr.mxu0 0.0
        %1022 = vmatpush1.msra.mxu0 0.0
        %1023 = vmatprep.subr.mxu0 0.0
        %1024 = vmatpush1.msra.mxu0 0.0
        %1025 = vmatprep.subr.mxu0 0.0
        %1026 = vmatpush1.msra.mxu0 0.0
        %1027 = vmatprep.subr.mxu0 0.0
        %1028 = vmatpush1.msra.mxu0 0.0
        %1029 = vmatprep.subr.mxu0 0.0
        %1030 = vmatpush1.msra.mxu0 0.0
        %1031 = vmatprep.subr.mxu0 0.0
        %1032 = vmatpush1.msra.mxu0 0.0
        %1033 = vmatprep.subr.mxu0 0.0
        %1034 = vmatpush1.msra.mxu0 0.0
        %1035 = vmatprep.subr.mxu0 0.0
        %1036 = vmatpush1.msra.mxu0 0.0
        %1037 = vmatprep.subr.mxu0 0.0
        %1038 = vmatpush1.msra.mxu0 0.0
        %1039 = vmatprep.subr.mxu0 0.0
        %1040 = vmatpush1.msra.mxu0 0.0
        %1041 = vmatprep.subr.mxu0 0.0
        %1042 = vmatpush1.msra.mxu0 0.0
        %1043 = vmatprep.subr.mxu0 0.0
        %1044 = vmatpush1.msra.mxu0 0.0
        %1045 = vmatprep.subr.mxu0 0.0
        %1046 = vmatpush1.msra.mxu0 0.0
        %1047 = vmatprep.subr.mxu0 0.0
        %1048 = vmatpush1.msra.mxu0 0.0
        %1049 = vmatprep.subr.mxu0 0.0
        %1050 = vmatpush1.msra.mxu0 0.0
        %1051 = vmatprep.subr.mxu0 0.0
        %1052 = vmatpush1.msra.mxu0 0.0
        %1053 = vmatprep.subr.mxu0 0.0
        %1054 = vmatpush1.msra.mxu0 0.0
        %1055 = vmatprep.subr.mxu0 0.0
        %1056 = vmatpush1.msra.mxu0 0.0
        %1057 = vmatprep.subr.mxu0 0.0
        %1058 = vmatpush1.msra.mxu0 0.0
        %1059 = vmatprep.subr.mxu0 0.0
        %1060 = vmatpush1.msra.mxu0 0.0
        %1061 = vmatprep.subr.mxu0 0.0
        %1062 = vmatpush1.msra.mxu0 0.0
        %1063 = vmatprep.subr.mxu0 0.0
        %1064 = vmatpush1.msra.mxu0 0.0
        %1065 = vmatprep.subr.mxu0 0.0
        %1066 = vmatpush1.msra.mxu0 0.0
        %1067 = vmatprep.subr.mxu0 0.0
        %1068 = vmatpush1.msra.mxu0 0.0
        %1069 = vmatprep.subr.mxu0 0.0
        %1070 = vmatpush1.msra.mxu0 0.0
        %1071 = vmatprep.subr.mxu0 0.0
        %1072 = vmatpush1.msra.mxu0 0.0
        %1073 = vmatprep.mubr.f32.mxu0 0.0
        %1074 = vmatmul.mubr.f32.gmra.mrb[0].mxu0 %v1007
        %v1075 = vpop.f32.mrb[0].mxu0
        %v1076 = vadd.f32 0.0, %v1075
        %v1077 = vpop.f32.mrb[0].mxu0
        %1078 = vdwg.mxu0
        %1080 = vrot.lane.b32.xlu0 %v1076, 8
        %v1081 = vpop.permute.xlu0 %1080
        %vm1083 = vcmask 130112
        %1084 = vst.msk [vmem:[#allocation4] sm:$0xff] %vm1083, %v1081
        %v1085 = vld [vmem:[#allocation2] sm:$0xff]
        %v1086 = vld [vmem:[#allocation3] sm:$0xff]
        %1087 = vrot.lane.b32.xlu0 %v743, 112
        %v1088 = vpop.permute.xlu0 %1087
        %1090 = vrot.lane.b32.xlu0 %v1085, 112
        %v1091 = vpop.permute.xlu0 %1090
        %v1092 = vsel %vm748, %v1088, 0
        %v1094 = vsel %vm748, %v1091, 0
        %1096 = vmatprep.subr.mxu0 0.0
        %1097 = vmatpush1.xpose.msra.mxu0 %v1094
        %1098 = vmatprep.subr.mxu0 0.0
        %1099 = vmatpush1.xpose.msra.mxu0 0.0
        %1100 = vmatprep.subr.mxu0 0.0
        %1101 = vmatpush1.xpose.msra.mxu0 0.0
        %1102 = vmatprep.subr.mxu0 0.0
        %1103 = vmatpush1.xpose.msra.mxu0 0.0
        %1104 = vmatprep.subr.mxu0 0.0
        %1105 = vmatpush1.xpose.msra.mxu0 0.0
        %1106 = vmatprep.subr.mxu0 0.0
        %1107 = vmatpush1.xpose.msra.mxu0 0.0
        %1108 = vmatprep.subr.mxu0 0.0
        %1109 = vmatpush1.xpose.msra.mxu0 0.0
        %1110 = vmatprep.subr.mxu0 0.0
        %1111 = vmatpush1.xpose.msra.mxu0 0.0
        %1112 = vmatprep.subr.mxu0 0.0
        %1113 = vmatpush1.xpose.msra.mxu0 0.0
        %1114 = vmatprep.subr.mxu0 0.0
        %1115 = vmatpush1.xpose.msra.mxu0 0.0
        %1116 = vmatprep.subr.mxu0 0.0
        %1117 = vmatpush1.xpose.msra.mxu0 0.0
        %1118 = vmatprep.subr.mxu0 0.0
        %1119 = vmatpush1.xpose.msra.mxu0 0.0
        %1120 = vmatprep.subr.mxu0 0.0
        %1121 = vmatpush1.xpose.msra.mxu0 0.0
        %1122 = vmatprep.subr.mxu0 0.0
        %1123 = vmatpush1.xpose.msra.mxu0 0.0
        %1124 = vmatprep.subr.mxu0 0.0
        %1125 = vmatpush1.xpose.msra.mxu0 0.0
        %1126 = vmatprep.subr.mxu0 0.0
        %1127 = vmatpush1.xpose.msra.mxu0 0.0
        %1128 = vmatprep.subr.mxu0 0.0
        %1129 = vmatpush1.xpose.msra.mxu0 0.0
        %1130 = vmatprep.subr.mxu0 0.0
        %1131 = vmatpush1.xpose.msra.mxu0 0.0
        %1132 = vmatprep.subr.mxu0 0.0
        %1133 = vmatpush1.xpose.msra.mxu0 0.0
        %1134 = vmatprep.subr.mxu0 0.0
        %1135 = vmatpush1.xpose.msra.mxu0 0.0
        %1136 = vmatprep.subr.mxu0 0.0
        %1137 = vmatpush1.xpose.msra.mxu0 0.0
        %1138 = vmatprep.subr.mxu0 0.0
        %1139 = vmatpush1.xpose.msra.mxu0 0.0
        %1140 = vmatprep.subr.mxu0 0.0
        %1141 = vmatpush1.xpose.msra.mxu0 0.0
        %1142 = vmatprep.subr.mxu0 0.0
        %1143 = vmatpush1.xpose.msra.mxu0 0.0
        %1144 = vmatprep.subr.mxu0 0.0
        %1145 = vmatpush1.xpose.msra.mxu0 0.0
        %1146 = vmatprep.subr.mxu0 0.0
        %1147 = vmatpush1.xpose.msra.mxu0 0.0
        %1148 = vmatprep.subr.mxu0 0.0
        %1149 = vmatpush1.xpose.msra.mxu0 0.0
        %1150 = vmatprep.subr.mxu0 0.0
        %1151 = vmatpush1.xpose.msra.mxu0 0.0
        %1152 = vmatprep.subr.mxu0 0.0
        %1153 = vmatpush1.xpose.msra.mxu0 0.0
        %1154 = vmatprep.subr.mxu0 0.0
        %1155 = vmatpush1.xpose.msra.mxu0 0.0
        %1156 = vmatprep.subr.mxu0 0.0
        %1157 = vmatpush1.xpose.msra.mxu0 0.0
        %1158 = vmatprep.subr.mxu0 0.0
        %1159 = vmatpush1.xpose.msra.mxu0 0.0
        %1160 = vmatprep.mubr.f32.mxu0 0.0
        %1161 = vmatmul.mubr.f32.gmra.mrb[0].mxu0 %v1092
        %v1162 = vpop.f32.mrb[0].mxu0
        %v1163 = vadd.f32 0.0, %v1162
        %v1164 = vpop.f32.mrb[0].mxu0
        %1165 = vdwg.mxu0
        %v1166 = vsel %vm748, %v1163, -inf
        %1167 = vmax.xlane.f32.xlu0 %v1166
        %v1168 = vpop.xlane.xlu0 %1167
        %v1169 = vsub.f32 %v1163, %v1168
        %v1170 = vmul.f32 %v1169, 1.442695
        %v1171 = vpow.pop %v1170
        %v1172 = vsel %vm748, %v1171, 0.0
        %1173 = vadd.xlane.f32.xlu0 %v1172
        %v1174 = vpop.xlane.xlu0 %1173
        %v1175 = vrcp.pop %v1174
        %v1176 = vmul.f32 %v1171, %v1175
        %1178 = vrot.lane.b32.xlu0 %v1086, 112
        %v1179 = vpop.permute.xlu0 %1178
        %v1182 = vsel %vm748, %v1176, 0
        %1184 = vmatprep.subr.mxu0 0.0
        %1185 = vmatpush1.msra.mxu0 %v1179
        %1186 = vmatprep.subr.mxu0 0.0
        %1187 = vmatpush1.msra.mxu0 0.0
        %1188 = vmatprep.subr.mxu0 0.0
        %1189 = vmatpush1.msra.mxu0 0.0
        %1190 = vmatprep.subr.mxu0 0.0
        %1191 = vmatpush1.msra.mxu0 0.0
        %1192 = vmatprep.subr.mxu0 0.0
        %1193 = vmatpush1.msra.mxu0 0.0
        %1194 = vmatprep.subr.mxu0 0.0
        %1195 = vmatpush1.msra.mxu0 0.0
        %1196 = vmatprep.subr.mxu0 0.0
        %1197 = vmatpush1.msra.mxu0 0.0
        %1198 = vmatprep.subr.mxu0 0.0
        %1199 = vmatpush1.msra.mxu0 0.0
        %1200 = vmatprep.subr.mxu0 0.0
        %1201 = vmatpush1.msra.mxu0 0.0
        %1202 = vmatprep.subr.mxu0 0.0
        %1203 = vmatpush1.msra.mxu0 0.0
        %1204 = vmatprep.subr.mxu0 0.0
        %1205 = vmatpush1.msra.mxu0 0.0
        %1206 = vmatprep.subr.mxu0 0.0
        %1207 = vmatpush1.msra.mxu0 0.0
        %1208 = vmatprep.subr.mxu0 0.0
        %1209 = vmatpush1.msra.mxu0 0.0
        %1210 = vmatprep.subr.mxu0 0.0
        %1211 = vmatpush1.msra.mxu0 0.0
        %1212 = vmatprep.subr.mxu0 0.0
        %1213 = vmatpush1.msra.mxu0 0.0
        %1214 = vmatprep.subr.mxu0 0.0
        %1215 = vmatpush1.msra.mxu0 0.0
        %1216 = vmatprep.subr.mxu0 0.0
        %1217 = vmatpush1.msra.mxu0 0.0
        %1218 = vmatprep.subr.mxu0 0.0
        %1219 = vmatpush1.msra.mxu0 0.0
        %1220 = vmatprep.subr.mxu0 0.0
        %1221 = vmatpush1.msra.mxu0 0.0
        %1222 = vmatprep.subr.mxu0 0.0
        %1223 = vmatpush1.msra.mxu0 0.0
        %1224 = vmatprep.subr.mxu0 0.0
        %1225 = vmatpush1.msra.mxu0 0.0
        %1226 = vmatprep.subr.mxu0 0.0
        %1227 = vmatpush1.msra.mxu0 0.0
        %1228 = vmatprep.subr.mxu0 0.0
        %1229 = vmatpush1.msra.mxu0 0.0
        %1230 = vmatprep.subr.mxu0 0.0
        %1231 = vmatpush1.msra.mxu0 0.0
        %1232 = vmatprep.subr.mxu0 0.0
        %1233 = vmatpush1.msra.mxu0 0.0
        %1234 = vmatprep.subr.mxu0 0.0
        %1235 = vmatpush1.msra.mxu0 0.0
        %1236 = vmatprep.subr.mxu0 0.0
        %1237 = vmatpush1.msra.mxu0 0.0
        %1238 = vmatprep.subr.mxu0 0.0
        %1239 = vmatpush1.msra.mxu0 0.0
        %1240 = vmatprep.subr.mxu0 0.0
        %1241 = vmatpush1.msra.mxu0 0.0
        %1242 = vmatprep.subr.mxu0 0.0
        %1243 = vmatpush1.msra.mxu0 0.0
        %1244 = vmatprep.subr.mxu0 0.0
        %1245 = vmatpush1.msra.mxu0 0.0
        %1246 = vmatprep.subr.mxu0 0.0
        %1247 = vmatpush1.msra.mxu0 0.0
        %1248 = vmatprep.mubr.f32.mxu0 0.0
        %1249 = vmatmul.mubr.f32.gmra.mrb[0].mxu0 %v1182
        %v1250 = vpop.f32.mrb[0].mxu0
        %v1251 = vadd.f32 0.0, %v1250
        %v1252 = vpop.f32.mrb[0].mxu0
        %1253 = vdwg.mxu0
        %1255 = vrot.lane.b32.xlu0 %v1251, 16
        %v1256 = vpop.permute.xlu0 %1255
        %vm1258 = vcmask 195712
        %1259 = vst.msk [vmem:[#allocation4] sm:$0xff] %vm1258, %v1256
        %v1260 = vld [vmem:[#allocation2] sm:$0xff]
        %v1261 = vld [vmem:[#allocation3] sm:$0xff]
        %1262 = vrot.lane.b32.xlu0 %v743, 104
        %v1263 = vpop.permute.xlu0 %1262
        %1265 = vrot.lane.b32.xlu0 %v1260, 104
        %v1266 = vpop.permute.xlu0 %1265
        %v1267 = vsel %vm748, %v1263, 0
        %v1269 = vsel %vm748, %v1266, 0
        %1271 = vmatprep.subr.mxu0 0.0
        %1272 = vmatpush1.xpose.msra.mxu0 %v1269
        %1273 = vmatprep.subr.mxu0 0.0
        %1274 = vmatpush1.xpose.msra.mxu0 0.0
        %1275 = vmatprep.subr.mxu0 0.0
        %1276 = vmatpush1.xpose.msra.mxu0 0.0
        %1277 = vmatprep.subr.mxu0 0.0
        %1278 = vmatpush1.xpose.msra.mxu0 0.0
        %1279 = vmatprep.subr.mxu0 0.0
        %1280 = vmatpush1.xpose.msra.mxu0 0.0
        %1281 = vmatprep.subr.mxu0 0.0
        %1282 = vmatpush1.xpose.msra.mxu0 0.0
        %1283 = vmatprep.subr.mxu0 0.0
        %1284 = vmatpush1.xpose.msra.mxu0 0.0
        %1285 = vmatprep.subr.mxu0 0.0
        %1286 = vmatpush1.xpose.msra.mxu0 0.0
        %1287 = vmatprep.subr.mxu0 0.0
        %1288 = vmatpush1.xpose.msra.mxu0 0.0
        %1289 = vmatprep.subr.mxu0 0.0
        %1290 = vmatpush1.xpose.msra.mxu0 0.0
        %1291 = vmatprep.subr.mxu0 0.0
        %1292 = vmatpush1.xpose.msra.mxu0 0.0
        %1293 = vmatprep.subr.mxu0 0.0
        %1294 = vmatpush1.xpose.msra.mxu0 0.0
        %1295 = vmatprep.subr.mxu0 0.0
        %1296 = vmatpush1.xpose.msra.mxu0 0.0
        %1297 = vmatprep.subr.mxu0 0.0
        %1298 = vmatpush1.xpose.msra.mxu0 0.0
        %1299 = vmatprep.subr.mxu0 0.0
        %1300 = vmatpush1.xpose.msra.mxu0 0.0
        %1301 = vmatprep.subr.mxu0 0.0
        %1302 = vmatpush1.xpose.msra.mxu0 0.0
        %1303 = vmatprep.subr.mxu0 0.0
        %1304 = vmatpush1.xpose.msra.mxu0 0.0
        %1305 = vmatprep.subr.mxu0 0.0
        %1306 = vmatpush1.xpose.msra.mxu0 0.0
        %1307 = vmatprep.subr.mxu0 0.0
        %1308 = vmatpush1.xpose.msra.mxu0 0.0
        %1309 = vmatprep.subr.mxu0 0.0
        %1310 = vmatpush1.xpose.msra.mxu0 0.0
        %1311 = vmatprep.subr.mxu0 0.0
        %1312 = vmatpush1.xpose.msra.mxu0 0.0
        %1313 = vmatprep.subr.mxu0 0.0
        %1314 = vmatpush1.xpose.msra.mxu0 0.0
        %1315 = vmatprep.subr.mxu0 0.0
        %1316 = vmatpush1.xpose.msra.mxu0 0.0
        %1317 = vmatprep.subr.mxu0 0.0
        %1318 = vmatpush1.xpose.msra.mxu0 0.0
        %1319 = vmatprep.subr.mxu0 0.0
        %1320 = vmatpush1.xpose.msra.mxu0 0.0
        %1321 = vmatprep.subr.mxu0 0.0
        %1322 = vmatpush1.xpose.msra.mxu0 0.0
        %1323 = vmatprep.subr.mxu0 0.0
        %1324 = vmatpush1.xpose.msra.mxu0 0.0
        %1325 = vmatprep.subr.mxu0 0.0
        %1326 = vmatpush1.xpose.msra.mxu0 0.0
        %1327 = vmatprep.subr.mxu0 0.0
        %1328 = vmatpush1.xpose.msra.mxu0 0.0
        %1329 = vmatprep.subr.mxu0 0.0
        %1330 = vmatpush1.xpose.msra.mxu0 0.0
        %1331 = vmatprep.subr.mxu0 0.0
        %1332 = vmatpush1.xpose.msra.mxu0 0.0
        %1333 = vmatprep.subr.mxu0 0.0
        %1334 = vmatpush1.xpose.msra.mxu0 0.0
        %1335 = vmatprep.mubr.f32.mxu0 0.0
        %1336 = vmatmul.mubr.f32.gmra.mrb[0].mxu0 %v1267
        %v1337 = vpop.f32.mrb[0].mxu0
        %v1338 = vadd.f32 0.0, %v1337
        %v1339 = vpop.f32.mrb[0].mxu0
        %1340 = vdwg.mxu0
        %v1341 = vsel %vm748, %v1338, -inf
        %1342 = vmax.xlane.f32.xlu0 %v1341
        %v1343 = vpop.xlane.xlu0 %1342
        %v1344 = vsub.f32 %v1338, %v1343
        %v1345 = vmul.f32 %v1344, 1.442695
        %v1346 = vpow.pop %v1345
        %v1347 = vsel %vm748, %v1346, 0.0
        %1348 = vadd.xlane.f32.xlu0 %v1347
        %v1349 = vpop.xlane.xlu0 %1348
        %v1350 = vrcp.pop %v1349
        %v1351 = vmul.f32 %v1346, %v1350
        %1353 = vrot.lane.b32.xlu0 %v1261, 104
        %v1354 = vpop.permute.xlu0 %1353
        %v1357 = vsel %vm748, %v1351, 0
        %1359 = vmatprep.subr.mxu0 0.0
        %1360 = vmatpush1.msra.mxu0 %v1354
        %1361 = vmatprep.subr.mxu0 0.0
        %1362 = vmatpush1.msra.mxu0 0.0
        %1363 = vmatprep.subr.mxu0 0.0
        %1364 = vmatpush1.msra.mxu0 0.0
        %1365 = vmatprep.subr.mxu0 0.0
        %1366 = vmatpush1.msra.mxu0 0.0
        %1367 = vmatprep.subr.mxu0 0.0
        %1368 = vmatpush1.msra.mxu0 0.0
        %1369 = vmatprep.subr.mxu0 0.0
        %1370 = vmatpush1.msra.mxu0 0.0
        %1371 = vmatprep.subr.mxu0 0.0
        %1372 = vmatpush1.msra.mxu0 0.0
        %1373 = vmatprep.subr.mxu0 0.0
        %1374 = vmatpush1.msra.mxu0 0.0
        %1375 = vmatprep.subr.mxu0 0.0
        %1376 = vmatpush1.msra.mxu0 0.0
        %1377 = vmatprep.subr.mxu0 0.0
        %1378 = vmatpush1.msra.mxu0 0.0
        %1379 = vmatprep.subr.mxu0 0.0
        %1380 = vmatpush1.msra.mxu0 0.0
        %1381 = vmatprep.subr.mxu0 0.0
        %1382 = vmatpush1.msra.mxu0 0.0
        %1383 = vmatprep.subr.mxu0 0.0
        %1384 = vmatpush1.msra.mxu0 0.0
        %1385 = vmatprep.subr.mxu0 0.0
        %1386 = vmatpush1.msra.mxu0 0.0
        %1387 = vmatprep.subr.mxu0 0.0
        %1388 = vmatpush1.msra.mxu0 0.0
        %1389 = vmatprep.subr.mxu0 0.0
        %1390 = vmatpush1.msra.mxu0 0.0
        %1391 = vmatprep.subr.mxu0 0.0
        %1392 = vmatpush1.msra.mxu0 0.0
        %1393 = vmatprep.subr.mxu0 0.0
        %1394 = vmatpush1.msra.mxu0 0.0
        %1395 = vmatprep.subr.mxu0 0.0
        %1396 = vmatpush1.msra.mxu0 0.0
        %1397 = vmatprep.subr.mxu0 0.0
        %1398 = vmatpush1.msra.mxu0 0.0
        %1399 = vmatprep.subr.mxu0 0.0
        %1400 = vmatpush1.msra.mxu0 0.0
        %1401 = vmatprep.subr.mxu0 0.0
        %1402 = vmatpush1.msra.mxu0 0.0
        %1403 = vmatprep.subr.mxu0 0.0
        %1404 = vmatpush1.msra.mxu0 0.0
        %1405 = vmatprep.subr.mxu0 0.0
        %1406 = vmatpush1.msra.mxu0 0.0
        %1407 = vmatprep.subr.mxu0 0.0
        %1408 = vmatpush1.msra.mxu0 0.0
        %1409 = vmatprep.subr.mxu0 0.0
        %1410 = vmatpush1.msra.mxu0 0.0
        %1411 = vmatprep.subr.mxu0 0.0
        %1412 = vmatpush1.msra.mxu0 0.0
        %1413 = vmatprep.subr.mxu0 0.0
        %1414 = vmatpush1.msra.mxu0 0.0
        %1415 = vmatprep.subr.mxu0 0.0
        %1416 = vmatpush1.msra.mxu0 0.0
        %1417 = vmatprep.subr.mxu0 0.0
        %1418 = vmatpush1.msra.mxu0 0.0
        %1419 = vmatprep.subr.mxu0 0.0
        %1420 = vmatpush1.msra.mxu0 0.0
        %1421 = vmatprep.subr.mxu0 0.0
        %1422 = vmatpush1.msra.mxu0 0.0
        %1423 = vmatprep.mubr.f32.mxu0 0.0
        %1424 = vmatmul.mubr.f32.gmra.mrb[0].mxu0 %v1357
        %v1425 = vpop.f32.mrb[0].mxu0
        %v1426 = vadd.f32 0.0, %v1425
        %v1427 = vpop.f32.mrb[0].mxu0
        %1428 = vdwg.mxu0
        %1430 = vrot.lane.b32.xlu0 %v1426, 24
        %v1431 = vpop.permute.xlu0 %1430
        %vm1433 = vcmask 261312
        %1434 = vst.msk [vmem:[#allocation4] sm:$0xff] %vm1433, %v1431
        %v1435 = vld [vmem:[#allocation4] sm:$0xff]
        %v1436 = vld [vmem:[#allocation14] sm:$0xff]
        %v1437 = vld [vmem:[#allocation14 + $0x8] sm:$0xff]
        %v1438 = vld [vmem:[#allocation14 + $0x10] sm:$0xff]
        %v1439 = vld [vmem:[#allocation14 + $0x18] sm:$0xff]
        %v1440 = vld [vmem:[%s9] sm:$0x1]
        %v1442 = vlaneseq
        %v1443 = vshrl.u32 %v1442, 7
        %v1444 = vsub.s32 0, %v1443
        %v1445 = vrot.slane %v1440, %v1444
        %v1448 = vsel %vm672, %v1435, 0
        %1450 = vmatprep.subr.mxu0 0.0
        %1451 = vmatpush1.msra.mxu0 %v1436
        %1452 = vmatprep.subr.mxu0 0.0
        %1453 = vmatpush1.msra.mxu0 %v1437
        %1454 = vmatprep.subr.mxu0 0.0
        %1455 = vmatpush1.msra.mxu0 %v1438
        %1456 = vmatprep.subr.mxu0 0.0
        %1457 = vmatpush1.msra.mxu0 %v1439
        %1458 = vmatprep.subr.mxu0 0.0
        %1459 = vmatpush1.msra.mxu0 0.0
        %1460 = vmatprep.subr.mxu0 0.0
        %1461 = vmatpush1.msra.mxu0 0.0
        %1462 = vmatprep.subr.mxu0 0.0
        %1463 = vmatpush1.msra.mxu0 0.0
        %1464 = vmatprep.subr.mxu0 0.0
        %1465 = vmatpush1.msra.mxu0 0.0
        %1466 = vmatprep.subr.mxu0 0.0
        %1467 = vmatpush1.msra.mxu0 0.0
        %1468 = vmatprep.subr.mxu0 0.0
        %1469 = vmatpush1.msra.mxu0 0.0
        %1470 = vmatprep.subr.mxu0 0.0
        %1471 = vmatpush1.msra.mxu0 0.0
        %1472 = vmatprep.subr.mxu0 0.0
        %1473 = vmatpush1.msra.mxu0 0.0
        %1474 = vmatprep.subr.mxu0 0.0
        %1475 = vmatpush1.msra.mxu0 0.0
        %1476 = vmatprep.subr.mxu0 0.0
        %1477 = vmatpush1.msra.mxu0 0.0
        %1478 = vmatprep.subr.mxu0 0.0
        %1479 = vmatpush1.msra.mxu0 0.0
        %1480 = vmatprep.subr.mxu0 0.0
        %1481 = vmatpush1.msra.mxu0 0.0
        %1482 = vmatprep.subr.mxu0 0.0
        %1483 = vmatpush1.msra.mxu0 0.0
        %1484 = vmatprep.subr.mxu0 0.0
        %1485 = vmatpush1.msra.mxu0 0.0
        %1486 = vmatprep.subr.mxu0 0.0
        %1487 = vmatpush1.msra.mxu0 0.0
        %1488 = vmatprep.subr.mxu0 0.0
        %1489 = vmatpush1.msra.mxu0 0.0
        %1490 = vmatprep.subr.mxu0 0.0
        %1491 = vmatpush1.msra.mxu0 0.0
        %1492 = vmatprep.subr.mxu0 0.0
        %1493 = vmatpush1.msra.mxu0 0.0
        %1494 = vmatprep.subr.mxu0 0.0
        %1495 = vmatpush1.msra.mxu0 0.0
        %1496 = vmatprep.subr.mxu0 0.0
        %1497 = vmatpush1.msra.mxu0 0.0
        %1498 = vmatprep.subr.mxu0 0.0
        %1499 = vmatpush1.msra.mxu0 0.0
        %1500 = vmatprep.subr.mxu0 0.0
        %1501 = vmatpush1.msra.mxu0 0.0
        %1502 = vmatprep.subr.mxu0 0.0
        %1503 = vmatpush1.msra.mxu0 0.0
        %1504 = vmatprep.subr.mxu0 0.0
        %1505 = vmatpush1.msra.mxu0 0.0
        %1506 = vmatprep.subr.mxu0 0.0
        %1507 = vmatpush1.msra.mxu0 0.0
        %1508 = vmatprep.subr.mxu0 0.0
        %1509 = vmatpush1.msra.mxu0 0.0
        %1510 = vmatprep.subr.mxu0 0.0
        %1511 = vmatpush1.msra.mxu0 0.0
        %1512 = vmatprep.subr.mxu0 0.0
        %1513 = vmatpush1.msra.mxu0 0.0
        %1514 = vmatprep.mubr.f32.mxu0 0.0
        %1515 = vmatmul.mubr.f32.gmra.mrb[0].mxu0 %v1448
        %v1516 = vpop.f32.mrb[0].mxu0
        %v1517 = vadd.f32 %v1445, %v1516
        %v1518 = vpop.f32.mrb[0].mxu0
        %1519 = vdwg.mxu0
        %1520 = vst.msk [vmem:[%s486] sm:$0xff] %vm672, %v1517
        %s1521 = sand.u32 %s276, 1
        %s1522 = scalar_lea.sflag [#allocation7], %s1521
        %s1523 = sand.u32 %s276, 1
        %s1524 = smul.addr %s1523, 8
        %s1525 = scalar_lea.vmem [#allocation16], %s1524
        // Predicated region
        $region89: #{tpu_custom_call.1} parent=59 // pred_check
          %p1526 = pneg %p286
        $region90: #{tpu_custom_call.1} parent=59 // pred_check_branch
          %1528 = sbr.rel (%p1526) target = $region92
        $region91: #{tpu_custom_call.1} parent=59 // pred_region
          %s1530 = ssub.s32 128, 128
          %1531 = vsyncadd %s1522, %s1530
          %s1532 = sadd.s32 %s37, %s36
          %s1533 = smul.addr %s1532, 128
          %s1534 = scalar_lea.hbm %s10, %s1533
          %s1536 = sshll.u32 %s1525, 4
          %s1537 = int_to_ptr.vmem [resolvable:$true] %s1536
          %1539 = dma.vmem_to_hbm [thread:$0]  %s1537, 128, %s1534, %s1522
        $region92: #{tpu_custom_call.1} parent=59 // pred_fallthru
          _
      $region60: #{tpu_custom_call.1} parent=5 // pred_fallthru
        _
      %p1540 = scmp.le.s32.totalorder 2, %s27
      // Predicated region
      $region93: #{tpu_custom_call.1} parent=5 // pred_check
        %p1541 = pneg %p1540
      $region94: #{tpu_custom_call.1} parent=5 // pred_check_branch
        %1543 = sbr.rel (%p1541) target = $region96
      $region95: #{tpu_custom_call.1} parent=5 // pred_region
        %s1544 = ssub.s32 %s27, 2
        // Predicated region
        $region97: #{tpu_custom_call.1} parent=95 // pred_check
          %p1545 = pneg %p292
        $region98: #{tpu_custom_call.1} parent=95 // pred_check_branch
          %1547 = sbr.rel (%p1545) target = $region100
        $region99: #{tpu_custom_call.1} parent=95 // pred_region
          %s1548 = sand.u32 %s277, 1
          %s1549 = scalar_lea.sflag [#allocation7], %s1548
          %s1550 = sand.u32 %s277, 1
          %s1551 = smul.addr %s1550, 8
          %s1552 = scalar_lea.vmem [#allocation16], %s1551
          %1553 = dma.done %s1549, 128
        $region100: #{tpu_custom_call.1} parent=95 // pred_fallthru
          _
      $region96: #{tpu_custom_call.1} parent=5 // pred_fallthru
        _
    $region6: #{tpu_custom_call.1} parent=1 // loop_footer
      %s31 = sadd.s32 1, %s27
    $region7: #{tpu_custom_call.1} parent=1 // loop_footer_branch
      %26 = sbr.rel target = $region3
    $region8: #{tpu_custom_call.1} parent=1 // loop_exit
      _
    %1554 = vsyncpa [#allocation6], 1
    %s1555 = scalar_lea.sflag [#allocation6], 1
    %1556 = vsyncpa %s1555, 1
    %1557 = vsyncpa [#allocation9], 1
    %s1558 = scalar_lea.sflag [#allocation9], 1
    %1559 = vsyncpa %s1558, 1
    %1560 = vsyncpa [#allocation12], 1
    %1561 = vsyncpa [#allocation15], 1
    %1562 = vsyncpa [#allocation7], 1
    %s1563 = scalar_lea.sflag [#allocation7], 1
    %1564 = vsyncpa %s1563, 1

</llo_original>
